<compile_context>
chip_gen: v5e
topology: v5e:2x2
jax: 0.10.0
libtpu: 0.0.40
codegen_flags: <defaults>
</compile_context>

<pallas_src>
import jax
import jax.numpy as jnp
import numpy as np
from jax.experimental import pallas as pl
from jax.experimental.pallas import tpu as pltpu


def _head_kernel(x_ref, gw_ref, gb_ref, tw_ref, tb_ref, pw_ref, pb_ref,
                 ww_ref, wb_ref, fc1_ref, fc2_ref, out_ref):
    Bblk, N, C = x_ref.shape
    Ci = gw_ref.shape[1]

    x = x_ref[...]                               # (Bblk, N, C) bf16
    x2d = x.reshape(Bblk * N, C)                 # pack batch into the MXU M dimension

    # ---------------- NonLocalBlock: 1x1 convs == channel matmuls ----------------
    g2d = jnp.dot(x2d, gw_ref[...], preferred_element_type=jnp.float32) + gb_ref[...]
    t2d = jnp.dot(x2d, tw_ref[...], preferred_element_type=jnp.float32) + tb_ref[...]
    p2d = jnp.dot(x2d, pw_ref[...], preferred_element_type=jnp.float32) + pb_ref[...]

    g_x   = g2d.reshape(Bblk, N, Ci).astype(jnp.bfloat16)
    theta = t2d.reshape(Bblk, N, Ci).astype(jnp.bfloat16)
    phi   = p2d.reshape(Bblk, N, Ci).astype(jnp.bfloat16)

    # Attention scores: contract the channel dim directly (no phi^T materialization).
    f = jnp.einsum('bnc,bmc->bnm', theta, phi,
                   preferred_element_type=jnp.float32)          # (Bblk, N, N) f32
    f = f - jnp.max(f, axis=-1, keepdims=True)
    e = jnp.exp(f)
    p_attn = e * pl.reciprocal(jnp.sum(e, axis=-1, keepdims=True), approx=True)

    y = jnp.einsum('bnm,bmc->bnc', p_attn.astype(jnp.bfloat16), g_x,
                   preferred_element_type=jnp.float32)          # (Bblk, N, Ci) f32

    w_y = jnp.dot(y.reshape(Bblk * N, Ci).astype(jnp.bfloat16), ww_ref[...],
                  preferred_element_type=jnp.float32) + wb_ref[...]
    z = w_y.reshape(Bblk, N, C) + x.astype(jnp.float32)         # residual, f32

    # ---------------- SEBlock ----------------
    s = jnp.mean(z, axis=1)                                     # (Bblk, C) squeeze, f32
    h = jnp.maximum(jnp.dot(s.astype(jnp.bfloat16), fc1_ref[...],
                            preferred_element_type=jnp.float32), 0.0)
    gate = jax.nn.sigmoid(jnp.dot(h.astype(jnp.bfloat16), fc2_ref[...],
                                  preferred_element_type=jnp.float32))  # (Bblk, C) f32
    xs = z * gate[:, None, :]                                   # excitation

    # ---------------- GAP + GMP ----------------
    pooled = jnp.mean(xs, axis=1) + jnp.max(xs, axis=1)         # (Bblk, C) f32
    out_ref[...] = pooled[:, None, :].astype(out_ref.dtype)


def _vmem_limit_bytes(Bblk, N, C, Ci, Cr):
    """Resident-set estimate with headroom, clamped to [32 MiB, 64 MiB] (v7x physical)."""
    bf16, f32 = 2, 4
    weights = bf16 * (3 * C * Ci + Ci * C + C * Cr + Cr * C)    # single-buffered
    biases  = f32 * (3 * Ci + C)
    x_blk   = 2 * Bblk * N * C * bf16                           # double-buffered input
    out_blk = 2 * Bblk * C * f32
    interm  = f32 * (3 * Bblk * N * Ci + Bblk * N * N + 2 * Bblk * N * C)
    est = int(1.5 * (weights + biases + x_blk + out_blk + interm))
    return max(32 * 1024 * 1024, min(est, 64 * 1024 * 1024))


def resnet_backbone_head(x_flat, params, block_b=4):
    """x_flat: (B, N, C) float32 backbone feature map. Returns (B, C) float32."""
    B, N, C = x_flat.shape
    Ci = params["gw"].shape[1]
    Cr = params["fc1"].shape[1]

    Bblk = min(block_b, B)
    Bp = ((B + Bblk - 1) // Bblk) * Bblk
    if Bp != B:                                  # pad batch to a multiple of Bblk
        x_flat = jnp.pad(x_flat, ((0, Bp - B), (0, 0), (0, 0)))

    # bf16 matmul operands at the pallas_call boundary; biases stay f32 (added post-acc).
    x_bf = x_flat.astype(jnp.bfloat16)
    gw, tw, pw, ww = (params[k].astype(jnp.bfloat16) for k in ("gw", "tw", "pw", "ww"))
    fc1, fc2 = params["fc1"].astype(jnp.bfloat16), params["fc2"].astype(jnp.bfloat16)
    gb, tb, pb, wb = (params[k].astype(jnp.float32) for k in ("gb", "tb", "pb", "wb"))

    # Whole-array, single-buffered VMEM residents: the index map would be constant,
    # so pipelining / double-buffering the weights only doubles their footprint.
    wspec = pl.BlockSpec(memory_space=pltpu.MemorySpace.VMEM)

    out = pl.pallas_call(
        _head_kernel,
        out_shape=jax.ShapeDtypeStruct((Bp, 1, C), jnp.float32),
        grid=(Bp // Bblk,),
        in_specs=[pl.BlockSpec((Bblk, N, C), lambda b: (b, 0, 0))] + [wspec] * 10,
        out_specs=pl.BlockSpec((Bblk, 1, C), lambda b: (b, 0, 0)),
        compiler_params=pltpu.CompilerParams(
            dimension_semantics=("parallel",),
            vmem_limit_bytes=_vmem_limit_bytes(Bblk, N, C, Ci, Cr)),
    )(x_bf, gw, gb, tw, tb, pw, pb, ww, wb, fc1, fc2)
    return out.reshape(Bp, C)[:B]


def reference_head(x_flat, params):
    """Pure-JAX f32 reference of the same forward pass (for correctness check)."""
    def one(x):  # x: (N, C)
        g_x = x @ params["gw"] + params["gb"]
        th = x @ params["tw"] + params["tb"]
        ph = x @ params["pw"] + params["pb"]
        f = th @ ph.T
        p = jax.nn.softmax(f, axis=-1)
        y = p @ g_x
        z = y @ params["ww"] + params["wb"] + x
        s = jnp.mean(z, axis=0, keepdims=True)
        h = jnp.maximum(s @ params["fc1"], 0.0)
        gate = jax.nn.sigmoid(h @ params["fc2"])
        xs = z * gate
        return jnp.mean(xs, axis=0) + jnp.max(xs, axis=0)
    return jax.vmap(one)(x_flat)


if __name__ == "__main__":
    key = jax.random.PRNGKey(0)
    # Small stand-in shapes: feature_dim=64 (instead of 2048), 8x8 spatial map,
    # batch 8 so the grid (B/Bblk = 2) is a multiple of 2 for v7x's two TensorCores.
    B, C, H, W = 8, 64, 8, 8
    Ci = C // 2           # NonLocalBlock inter_channels
    Cr = C // 16          # SEBlock reduction

    ks = jax.random.split(key, 11)
    x_nchw = jax.random.normal(ks[0], (B, C, H, W), jnp.float32)  # output of self.features

    params = {
        # 1x1 conv weights stored as (C_in, C_out) matmul weights; biases as (1, C_out)
        "gw": jax.random.normal(ks[1], (C, Ci), jnp.float32) * 0.05,
        "gb": jax.random.normal(ks[2], (1, Ci), jnp.float32) * 0.05,
        "tw": jax.random.normal(ks[3], (C, Ci), jnp.float32) * 0.05,
        "tb": jax.random.normal(ks[4], (1, Ci), jnp.float32) * 0.05,
        "pw": jax.random.normal(ks[5], (C, Ci), jnp.float32) * 0.05,
        "pb": jax.random.normal(ks[6], (1, Ci), jnp.float32) * 0.05,
        # NOTE: the PyTorch module zero-initializes W (so z == x at init); small random
        # values are used here so the correctness check exercises the non-local path.
        "ww": jax.random.normal(ks[7], (Ci, C), jnp.float32) * 0.05,
        "wb": jax.random.normal(ks[8], (1, C), jnp.float32) * 0.05,
        # SE FC layers (no bias), stored as (in, out)
        "fc1": jax.random.normal(ks[9], (C, Cr), jnp.float32) * 0.05,
        "fc2": jax.random.normal(ks[10], (Cr, C), jnp.float32) * 0.05,
    }

    # NCHW -> [B, N, C]
    x_flat = jnp.transpose(x_nchw.reshape(B, C, H * W), (0, 2, 1))

    out = jax.block_until_ready(resnet_backbone_head(x_flat, params))
    ref = jax.block_until_ready(reference_head(x_flat, params))

    assert out.shape == (B, C)
    # bf16 matmul operands + approx reciprocal -> loosened tolerance vs f32 reference.
    np.testing.assert_allclose(np.asarray(out), np.asarray(ref), rtol=5e-2, atol=5e-2)
    print("KERNEL_OK")
</pallas_src>

<mosaic_0001>
module attributes {stable_mosaic.version = 11 : i64} {
  func.func @_head_kernel(%arg0: i32, %arg1: memref<4x64x64xbf16, #tpu.memory_space<vmem>>, %arg2: memref<64x32xbf16, #tpu.memory_space<vmem>>, %arg3: memref<1x32xf32, #tpu.memory_space<vmem>>, %arg4: memref<64x32xbf16, #tpu.memory_space<vmem>>, %arg5: memref<1x32xf32, #tpu.memory_space<vmem>>, %arg6: memref<64x32xbf16, #tpu.memory_space<vmem>>, %arg7: memref<1x32xf32, #tpu.memory_space<vmem>>, %arg8: memref<32x64xbf16, #tpu.memory_space<vmem>>, %arg9: memref<1x64xf32, #tpu.memory_space<vmem>>, %arg10: memref<64x4xbf16, #tpu.memory_space<vmem>>, %arg11: memref<4x64xbf16, #tpu.memory_space<vmem>>, %arg12: memref<4x1x64xf32, #tpu.memory_space<vmem>>) attributes {dimension_semantics = [#tpu.dimension_semantics<parallel>], iteration_bounds = array<i64: 2>, scalar_prefetch = 0 : i64, scratch_operands = 0 : i64, tpu.core_type = #tpu.core_type<tc>, window_params = [{transform_indices = @transform_0, window_bounds = array<i64: 4, 64, 64>}, {pipeline_mode = #tpu.pipeline_mode<synchronous>, transform_indices = @transform_1, window_bounds = array<i64: 64, 32>}, {pipeline_mode = #tpu.pipeline_mode<synchronous>, transform_indices = @transform_2, window_bounds = array<i64: 1, 32>}, {pipeline_mode = #tpu.pipeline_mode<synchronous>, transform_indices = @transform_3, window_bounds = array<i64: 64, 32>}, {pipeline_mode = #tpu.pipeline_mode<synchronous>, transform_indices = @transform_4, window_bounds = array<i64: 1, 32>}, {pipeline_mode = #tpu.pipeline_mode<synchronous>, transform_indices = @transform_5, window_bounds = array<i64: 64, 32>}, {pipeline_mode = #tpu.pipeline_mode<synchronous>, transform_indices = @transform_6, window_bounds = array<i64: 1, 32>}, {pipeline_mode = #tpu.pipeline_mode<synchronous>, transform_indices = @transform_7, window_bounds = array<i64: 32, 64>}, {pipeline_mode = #tpu.pipeline_mode<synchronous>, transform_indices = @transform_8, window_bounds = array<i64: 1, 64>}, {pipeline_mode = #tpu.pipeline_mode<synchronous>, transform_indices = @transform_9, window_bounds = array<i64: 64, 4>}, {pipeline_mode = #tpu.pipeline_mode<synchronous>, transform_indices = @transform_10, window_bounds = array<i64: 4, 64>}, {transform_indices = @transform_11, window_bounds = array<i64: 4, 1, 64>}]} {
    %c0 = arith.constant 0 : index
    %c0_0 = arith.constant 0 : index
    %c0_1 = arith.constant 0 : index
    %0 = vector.load %arg1[%c0, %c0_0, %c0_1] : memref<4x64x64xbf16, #tpu.memory_space<vmem>>, vector<4x64x64xbf16>
    %1 = vector.shape_cast %0 : vector<4x64x64xbf16> to vector<256x64xbf16>
    %c0_2 = arith.constant 0 : index
    %c0_3 = arith.constant 0 : index
    %2 = vector.load %arg2[%c0_2, %c0_3] : memref<64x32xbf16, #tpu.memory_space<vmem>>, vector<64x32xbf16>
    %cst = arith.constant dense<0.000000e+00> : vector<256x32xf32>
    %3 = tpu.matmul %1, %2, %cst {dimension_numbers = #tpu.dot_dimension_numbers<[1], [0], [0], [1], [0, 0, 1, 1], [], []>} : vector<256x64xbf16>, vector<64x32xbf16>, vector<256x32xf32> -> vector<256x32xf32>
    %c0_4 = arith.constant 0 : index
    %c0_5 = arith.constant 0 : index
    %4 = vector.load %arg3[%c0_4, %c0_5] : memref<1x32xf32, #tpu.memory_space<vmem>>, vector<1x32xf32>
    %5 = vector.broadcast %4 : vector<1x32xf32> to vector<256x32xf32>
    %6 = arith.addf %3, %5 : vector<256x32xf32>
    %c0_6 = arith.constant 0 : index
    %c0_7 = arith.constant 0 : index
    %7 = vector.load %arg4[%c0_6, %c0_7] : memref<64x32xbf16, #tpu.memory_space<vmem>>, vector<64x32xbf16>
    %cst_8 = arith.constant dense<0.000000e+00> : vector<256x32xf32>
    %8 = tpu.matmul %1, %7, %cst_8 {dimension_numbers = #tpu.dot_dimension_numbers<[1], [0], [0], [1], [0, 0, 1, 1], [], []>} : vector<256x64xbf16>, vector<64x32xbf16>, vector<256x32xf32> -> vector<256x32xf32>
    %c0_9 = arith.constant 0 : index
    %c0_10 = arith.constant 0 : index
    %9 = vector.load %arg5[%c0_9, %c0_10] : memref<1x32xf32, #tpu.memory_space<vmem>>, vector<1x32xf32>
    %10 = vector.broadcast %9 : vector<1x32xf32> to vector<256x32xf32>
    %11 = arith.addf %8, %10 : vector<256x32xf32>
    %c0_11 = arith.constant 0 : index
    %c0_12 = arith.constant 0 : index
    %12 = vector.load %arg6[%c0_11, %c0_12] : memref<64x32xbf16, #tpu.memory_space<vmem>>, vector<64x32xbf16>
    %cst_13 = arith.constant dense<0.000000e+00> : vector<256x32xf32>
    %13 = tpu.matmul %1, %12, %cst_13 {dimension_numbers = #tpu.dot_dimension_numbers<[1], [0], [0], [1], [0, 0, 1, 1], [], []>} : vector<256x64xbf16>, vector<64x32xbf16>, vector<256x32xf32> -> vector<256x32xf32>
    %c0_14 = arith.constant 0 : index
    %c0_15 = arith.constant 0 : index
    %14 = vector.load %arg7[%c0_14, %c0_15] : memref<1x32xf32, #tpu.memory_space<vmem>>, vector<1x32xf32>
    %15 = vector.broadcast %14 : vector<1x32xf32> to vector<256x32xf32>
    %16 = arith.addf %13, %15 : vector<256x32xf32>
    %17 = vector.shape_cast %6 : vector<256x32xf32> to vector<4x64x32xf32>
    %18 = arith.truncf %17 : vector<4x64x32xf32> to vector<4x64x32xbf16>
    %19 = vector.shape_cast %11 : vector<256x32xf32> to vector<4x64x32xf32>
    %20 = arith.truncf %19 : vector<4x64x32xf32> to vector<4x64x32xbf16>
    %21 = vector.shape_cast %16 : vector<256x32xf32> to vector<4x64x32xf32>
    %22 = arith.truncf %21 : vector<4x64x32xf32> to vector<4x64x32xbf16>
    "tpu.trace_start"() <{level = 10 : i32, message = "bnc,bmc->bnm"}> : () -> ()
    %cst_16 = arith.constant dense<0.000000e+00> : vector<4x64x64xf32>
    %23 = tpu.matmul %20, %22, %cst_16 {dimension_numbers = #tpu.dot_dimension_numbers<[2], [2], [1], [1], [0, 0, 0, 1, 1, 1], [0], [0]>} : vector<4x64x32xbf16>, vector<4x64x32xbf16>, vector<4x64x64xf32> -> vector<4x64x64xf32>
    "tpu.trace_stop"() : () -> ()
    %cst_17 = arith.constant dense<0xFF800000> : vector<4x64xf32>
    %24 = vector.multi_reduction <maximumf>, %23, %cst_17 [2] : vector<4x64x64xf32> to vector<4x64xf32>
    %25 = vector.shape_cast %24 : vector<4x64xf32> to vector<4x64x1xf32>
    %26 = vector.broadcast %25 : vector<4x64x1xf32> to vector<4x64x64xf32>
    %27 = arith.subf %23, %26 : vector<4x64x64xf32>
    %28 = math.exp %27 : vector<4x64x64xf32>
    %cst_18 = arith.constant dense<0.000000e+00> : vector<4x64xf32>
    %29 = vector.multi_reduction <add>, %28, %cst_18 [2] : vector<4x64x64xf32> to vector<4x64xf32>
    %30 = vector.shape_cast %29 : vector<4x64xf32> to vector<4x64x1xf32>
    %31 = tpu.reciprocal %30 {approx = true} : vector<4x64x1xf32> -> vector<4x64x1xf32>
    %32 = vector.broadcast %31 : vector<4x64x1xf32> to vector<4x64x64xf32>
    %33 = arith.mulf %28, %32 : vector<4x64x64xf32>
    %34 = arith.truncf %33 : vector<4x64x64xf32> to vector<4x64x64xbf16>
    "tpu.trace_start"() <{level = 10 : i32, message = "bnm,bmc->bnc"}> : () -> ()
    %cst_19 = arith.constant dense<0.000000e+00> : vector<4x64x32xf32>
    %35 = tpu.matmul %34, %18, %cst_19 {dimension_numbers = #tpu.dot_dimension_numbers<[2], [1], [1], [2], [0, 0, 0, 1, 1, 2], [0], [0]>} : vector<4x64x64xbf16>, vector<4x64x32xbf16>, vector<4x64x32xf32> -> vector<4x64x32xf32>
    "tpu.trace_stop"() : () -> ()
    %36 = vector.shape_cast %35 : vector<4x64x32xf32> to vector<256x32xf32>
    %37 = arith.truncf %36 : vector<256x32xf32> to vector<256x32xbf16>
    %c0_20 = arith.constant 0 : index
    %c0_21 = arith.constant 0 : index
    %38 = vector.load %arg8[%c0_20, %c0_21] : memref<32x64xbf16, #tpu.memory_space<vmem>>, vector<32x64xbf16>
    %cst_22 = arith.constant dense<0.000000e+00> : vector<256x64xf32>
    %39 = tpu.matmul %37, %38, %cst_22 {dimension_numbers = #tpu.dot_dimension_numbers<[1], [0], [0], [1], [0, 0, 1, 1], [], []>} : vector<256x32xbf16>, vector<32x64xbf16>, vector<256x64xf32> -> vector<256x64xf32>
    %c0_23 = arith.constant 0 : index
    %c0_24 = arith.constant 0 : index
    %40 = vector.load %arg9[%c0_23, %c0_24] : memref<1x64xf32, #tpu.memory_space<vmem>>, vector<1x64xf32>
    %41 = vector.broadcast %40 : vector<1x64xf32> to vector<256x64xf32>
    %42 = arith.addf %39, %41 : vector<256x64xf32>
    %43 = vector.shape_cast %42 : vector<256x64xf32> to vector<4x64x64xf32>
    %44 = arith.extf %0 : vector<4x64x64xbf16> to vector<4x64x64xf32>
    %45 = arith.addf %43, %44 : vector<4x64x64xf32>
    %cst_25 = arith.constant dense<0.000000e+00> : vector<4x64xf32>
    %46 = vector.multi_reduction <add>, %45, %cst_25 [1] : vector<4x64x64xf32> to vector<4x64xf32>
    %cst_26 = arith.constant 6.400000e+01 : f32
    %47 = vector.broadcast %cst_26 : f32 to vector<4x64xf32>
    %48 = arith.divf %46, %47 : vector<4x64xf32>
    %49 = arith.truncf %48 : vector<4x64xf32> to vector<4x64xbf16>
    %c0_27 = arith.constant 0 : index
    %c0_28 = arith.constant 0 : index
    %50 = vector.load %arg10[%c0_27, %c0_28] : memref<64x4xbf16, #tpu.memory_space<vmem>>, vector<64x4xbf16>
    %cst_29 = arith.constant dense<0.000000e+00> : vector<4x4xf32>
    %51 = tpu.matmul %49, %50, %cst_29 {dimension_numbers = #tpu.dot_dimension_numbers<[1], [0], [0], [1], [0, 0, 1, 1], [], []>} : vector<4x64xbf16>, vector<64x4xbf16>, vector<4x4xf32> -> vector<4x4xf32>
    %cst_30 = arith.constant 0.000000e+00 : f32
    %52 = vector.broadcast %cst_30 : f32 to vector<4x4xf32>
    %53 = arith.maximumf %51, %52 : vector<4x4xf32>
    %54 = arith.truncf %53 : vector<4x4xf32> to vector<4x4xbf16>
    %c0_31 = arith.constant 0 : index
    %c0_32 = arith.constant 0 : index
    %55 = vector.load %arg11[%c0_31, %c0_32] : memref<4x64xbf16, #tpu.memory_space<vmem>>, vector<4x64xbf16>
    %cst_33 = arith.constant dense<0.000000e+00> : vector<4x64xf32>
    %56 = tpu.matmul %54, %55, %cst_33 {dimension_numbers = #tpu.dot_dimension_numbers<[1], [0], [0], [1], [0, 0, 1, 1], [], []>} : vector<4x4xbf16>, vector<4x64xbf16>, vector<4x64xf32> -> vector<4x64xf32>
    %57 = arith.negf %56 : vector<4x64xf32>
    %58 = math.exp %57 : vector<4x64xf32>
    %cst_34 = arith.constant 1.000000e+00 : f32
    %59 = vector.broadcast %cst_34 : f32 to vector<4x64xf32>
    %60 = arith.addf %59, %58 : vector<4x64xf32>
    %61 = arith.divf %59, %60 : vector<4x64xf32>
    %62 = vector.shape_cast %61 : vector<4x64xf32> to vector<4x1x64xf32>
    %63 = vector.broadcast %62 : vector<4x1x64xf32> to vector<4x64x64xf32>
    %64 = arith.mulf %45, %63 : vector<4x64x64xf32>
    %cst_35 = arith.constant dense<0.000000e+00> : vector<4x64xf32>
    %65 = vector.multi_reduction <add>, %64, %cst_35 [1] : vector<4x64x64xf32> to vector<4x64xf32>
    %cst_36 = arith.constant 6.400000e+01 : f32
    %66 = vector.broadcast %cst_36 : f32 to vector<4x64xf32>
    %67 = arith.divf %65, %66 : vector<4x64xf32>
    %cst_37 = arith.constant dense<0xFF800000> : vector<4x64xf32>
    %68 = vector.multi_reduction <maximumf>, %64, %cst_37 [1] : vector<4x64x64xf32> to vector<4x64xf32>
    %69 = arith.addf %67, %68 : vector<4x64xf32>
    %70 = vector.shape_cast %69 : vector<4x64xf32> to vector<4x1x64xf32>
    %c0_38 = arith.constant 0 : index
    %c0_39 = arith.constant 0 : index
    %c0_40 = arith.constant 0 : index
    %71 = vector.load %arg12[%c0_38, %c0_39, %c0_40] : memref<4x1x64xf32, #tpu.memory_space<vmem>>, vector<4x1x64xf32>
    tpu.vector_store %arg12[%c0_38, %c0_39, %c0_40], %70 {strides = array<i32>} : memref<4x1x64xf32, #tpu.memory_space<vmem>>, vector<4x1x64xf32>,
    return
  }
  func.func @transform_0(%arg0: i32) -> (i32, i32, i32) {
    %c0_i32 = arith.constant 0 : i32
    %c0_i32_0 = arith.constant 0 : i32
    %c0_i32_1 = arith.constant 0 : i32
    return %arg0, %c0_i32, %c0_i32_0 : i32, i32, i32
  }
  func.func @transform_1(%arg0: i32) -> (i32, i32) {
    %c0_i32 = arith.constant 0 : i32
    %c0_i32_0 = arith.constant 0 : i32
    %c0_i32_1 = arith.constant 0 : i32
    return %c0_i32, %c0_i32_0 : i32, i32
  }
  func.func @transform_2(%arg0: i32) -> (i32, i32) {
    %c0_i32 = arith.constant 0 : i32
    %c0_i32_0 = arith.constant 0 : i32
    %c0_i32_1 = arith.constant 0 : i32
    return %c0_i32, %c0_i32_0 : i32, i32
  }
  func.func @transform_3(%arg0: i32) -> (i32, i32) {
    %c0_i32 = arith.constant 0 : i32
    %c0_i32_0 = arith.constant 0 : i32
    %c0_i32_1 = arith.constant 0 : i32
    return %c0_i32, %c0_i32_0 : i32, i32
  }
  func.func @transform_4(%arg0: i32) -> (i32, i32) {
    %c0_i32 = arith.constant 0 : i32
    %c0_i32_0 = arith.constant 0 : i32
    %c0_i32_1 = arith.constant 0 : i32
    return %c0_i32, %c0_i32_0 : i32, i32
  }
  func.func @transform_5(%arg0: i32) -> (i32, i32) {
    %c0_i32 = arith.constant 0 : i32
    %c0_i32_0 = arith.constant 0 : i32
    %c0_i32_1 = arith.constant 0 : i32
    return %c0_i32, %c0_i32_0 : i32, i32
  }
  func.func @transform_6(%arg0: i32) -> (i32, i32) {
    %c0_i32 = arith.constant 0 : i32
    %c0_i32_0 = arith.constant 0 : i32
    %c0_i32_1 = arith.constant 0 : i32
    return %c0_i32, %c0_i32_0 : i32, i32
  }
  func.func @transform_7(%arg0: i32) -> (i32, i32) {
    %c0_i32 = arith.constant 0 : i32
    %c0_i32_0 = arith.constant 0 : i32
    %c0_i32_1 = arith.constant 0 : i32
    return %c0_i32, %c0_i32_0 : i32, i32
  }
  func.func @transform_8(%arg0: i32) -> (i32, i32) {
    %c0_i32 = arith.constant 0 : i32
    %c0_i32_0 = arith.constant 0 : i32
    %c0_i32_1 = arith.constant 0 : i32
    return %c0_i32, %c0_i32_0 : i32, i32
  }
  func.func @transform_9(%arg0: i32) -> (i32, i32) {
    %c0_i32 = arith.constant 0 : i32
    %c0_i32_0 = arith.constant 0 : i32
    %c0_i32_1 = arith.constant 0 : i32
    return %c0_i32, %c0_i32_0 : i32, i32
  }
  func.func @transform_10(%arg0: i32) -> (i32, i32) {
    %c0_i32 = arith.constant 0 : i32
    %c0_i32_0 = arith.constant 0 : i32
    %c0_i32_1 = arith.constant 0 : i32
    return %c0_i32, %c0_i32_0 : i32, i32
  }
  func.func @transform_11(%arg0: i32) -> (i32, i32, i32) {
    %c0_i32 = arith.constant 0 : i32
    %c0_i32_0 = arith.constant 0 : i32
    %c0_i32_1 = arith.constant 0 : i32
    return %arg0, %c0_i32, %c0_i32_0 : i32, i32, i32
  }
}

</mosaic_0001>

<llo_original>
// kernel: tpu_custom_call.1
$region0: #{tpu_custom_call.1}
  #allocation0 [shape = 'u32[]', space=smem, size = 0x4, offset = 0x4, fixed_abs, tag = 'smem constant byte address 0x4 - core index']
  #allocation1 [shape = 'u32[72,128]{1,0:T(1,128)}', space=vmem, size = 0x9000, scoped, tag = 'internal scratch']
  %s0 = inlined_call_operand.hbm [shape: bf16[8,64,64], index: 0, kind: input, shape index: {}]
  %s1 = inlined_call_operand.vmem [shape: bf16[64,32], index: 1, kind: input, shape index: {}]
  %s2 = inlined_call_operand.vmem [shape: f32[1,32], index: 2, kind: input, shape index: {}]
  %s3 = inlined_call_operand.vmem [shape: bf16[64,32], index: 3, kind: input, shape index: {}]
  %s4 = inlined_call_operand.vmem [shape: f32[1,32], index: 4, kind: input, shape index: {}]
  %s5 = inlined_call_operand.vmem [shape: bf16[64,32], index: 5, kind: input, shape index: {}]
  %s6 = inlined_call_operand.vmem [shape: f32[1,32], index: 6, kind: input, shape index: {}]
  %s7 = inlined_call_operand.vmem [shape: bf16[32,64], index: 7, kind: input, shape index: {}]
  %s8 = inlined_call_operand.vmem [shape: f32[1,64], index: 8, kind: input, shape index: {}]
  %s9 = inlined_call_operand.vmem [shape: bf16[64,4], index: 9, kind: input, shape index: {}]
  %s10 = inlined_call_operand.vmem [shape: bf16[4,64], index: 10, kind: input, shape index: {}]
  %s11 = inlined_call_operand.hbm [shape: f32[8,1,64], index: 11, kind: output, shape index: {}]
  %s12 = sld [smem:[#allocation0]]
  $region81: #{tpu_custom_call.1} parent=0
    _
  %s14 = ssub.s32 1, %s12
  %s15 = scalar_select 0, %s14, %s12
  $region1: #{tpu_custom_call.1} parent=0
    #allocation2 [shape = 'u8[131072]{0}', space=vmem, size = 0x20000, scoped, tag = 'input window, operand 0']
    #allocation3 [shape = 's32[2]{0}', space=sflag, size = 0x8, scoped, tag = 'scoped memory for tpu_custom_call.1']
    #allocation4 [shape = 's32[2]{0}', space=sflag, size = 0x8, scoped, tag = 'scoped memory for tpu_custom_call.1']
    #allocation5 [shape = 'u8[4096]{0}', space=vmem, size = 0x1000, scoped, tag = 'output window, operand 0']
    %16 = vsyncpa [#allocation3], 0
    %s17 = scalar_lea.sflag [#allocation3], 1
    %18 = vsyncpa %s17, 0
    %19 = vsyncpa [#allocation4], 0
    %s20 = scalar_lea.sflag [#allocation4], 1
    %21 = vsyncpa %s20, 0
    loop: start=0, step=1, limit=4
    $region2: #{tpu_custom_call.1} parent=1 // loop_pre_header
      _
    $region3: #{tpu_custom_call.1} parent=1 // loop_header
      %s23 = sphi 0, %s27
      %p24 = scmp.ge.s32.totalorder %s23, 4
      %s33 = sphi 0, %s35
      %s36 = sphi 0, %s33
      %s37 = sphi 0, %s36
      %s53 = sphi 0, %s37
      %s57 = sphi 0, %s57
      %s59 = sphi 0, %s57
      %s60 = sphi 0, %s59
      %s74 = sphi 0, %s60
      %s78 = sphi 0, %s78
      %s80 = sphi 0, %s78
      %s81 = sphi 0, %s80
      %s95 = sphi 0, %s81
      %s99 = sphi 0, %s99
      %s101 = sphi 0, %s99
      %s102 = sphi 0, %s101
      %s116 = sphi 0, %s102
      %s120 = sphi 0, %s120
      %s122 = sphi 0, %s120
      %s123 = sphi 0, %s122
      %s137 = sphi 0, %s123
      %s141 = sphi 0, %s141
      %s143 = sphi 0, %s141
      %s144 = sphi 0, %s143
      %s158 = sphi 0, %s144
      %s162 = sphi 0, %s162
      %s164 = sphi 0, %s162
      %s165 = sphi 0, %s164
      %s179 = sphi 0, %s165
      %s183 = sphi 0, %s183
      %s185 = sphi 0, %s183
      %s186 = sphi 0, %s185
      %s200 = sphi 0, %s186
      %s204 = sphi 0, %s204
      %s206 = sphi 0, %s204
      %s207 = sphi 0, %s206
      %s221 = sphi 0, %s207
      %s225 = sphi 0, %s225
      %s227 = sphi 0, %s225
      %s228 = sphi 0, %s227
      %s242 = sphi 0, %s228
      %s246 = sphi 0, %s246
      %s248 = sphi 0, %s246
      %s249 = sphi 0, %s248
      %s263 = sphi 0, %s249
      %s269 = sphi 0, %s271
      %s272 = sphi 0, %s269
      %s273 = sphi 0, %s272
      %s289 = sphi 0, %s273
    $region4: #{tpu_custom_call.1} parent=1 // loop_header_branch
      %26 = sbr.rel (%p24) target = $region8
    $region5: #{tpu_custom_call.1} parent=1 // loop_body
      %s28 = ssub.s32 %s23, 1
      %s29 = ssub.s32 %s23, 2
      %s30 = sadd.s32 %s23, 1
      %s31 = ssub.s32 %s23, %s30
      %p32 = scmp.eq.s32.totalorder %s31, 0
      %s34 = sadd.s32 %s33, 1
      %s35 = scalar_select %p32, %s33, %s34
      %p38 = pneg %p32
      %p39 = scmp.eq.s32.totalorder %s23, 1
      %p40 = por %p38, %p39
      %p41 = scmp.ne.s32.totalorder %s33, %s36
      %p42 = scmp.eq.s32.totalorder %s23, 0
      %p43 = por %p41, %p42
      %p44 = scmp.ne.s32.totalorder %s33, %s36
      %p45 = scmp.eq.s32.totalorder %s28, 1
      %p46 = por %p44, %p45
      %p47 = scmp.ne.s32.totalorder %s36, %s37
      %p48 = scmp.eq.s32.totalorder %s28, 0
      %p49 = por %p47, %p48
      %p50 = scmp.ne.s32.totalorder %s36, %s37
      %p51 = scmp.eq.s32.totalorder %s29, 1
      %p52 = por %p50, %p51
      %p54 = scmp.ne.s32.totalorder %s37, %s53
      %p55 = scmp.eq.s32.totalorder %s29, 0
      %p56 = por %p54, %p55
      %s58 = sadd.s32 %s57, 1
      %p61 = scmp.eq.s32.totalorder %s23, 1
      %p62 = scmp.ne.s32.totalorder %s57, %s59
      %p63 = scmp.eq.s32.totalorder %s23, 0
      %p64 = por %p62, %p63
      %p65 = scmp.ne.s32.totalorder %s57, %s59
      %p66 = scmp.eq.s32.totalorder %s28, 1
      %p67 = por %p65, %p66
      %p68 = scmp.ne.s32.totalorder %s59, %s60
      %p69 = scmp.eq.s32.totalorder %s28, 0
      %p70 = por %p68, %p69
      %p71 = scmp.ne.s32.totalorder %s59, %s60
      %p72 = scmp.eq.s32.totalorder %s29, 1
      %p73 = por %p71, %p72
      %p75 = scmp.ne.s32.totalorder %s60, %s74
      %p76 = scmp.eq.s32.totalorder %s29, 0
      %p77 = por %p75, %p76
      %s79 = sadd.s32 %s78, 1
      %p82 = scmp.eq.s32.totalorder %s23, 1
      %p83 = scmp.ne.s32.totalorder %s78, %s80
      %p84 = scmp.eq.s32.totalorder %s23, 0
      %p85 = por %p83, %p84
      %p86 = scmp.ne.s32.totalorder %s78, %s80
      %p87 = scmp.eq.s32.totalorder %s28, 1
      %p88 = por %p86, %p87
      %p89 = scmp.ne.s32.totalorder %s80, %s81
      %p90 = scmp.eq.s32.totalorder %s28, 0
      %p91 = por %p89, %p90
      %p92 = scmp.ne.s32.totalorder %s80, %s81
      %p93 = scmp.eq.s32.totalorder %s29, 1
      %p94 = por %p92, %p93
      %p96 = scmp.ne.s32.totalorder %s81, %s95
      %p97 = scmp.eq.s32.totalorder %s29, 0
      %p98 = por %p96, %p97
      %s100 = sadd.s32 %s99, 1
      %p103 = scmp.eq.s32.totalorder %s23, 1
      %p104 = scmp.ne.s32.totalorder %s99, %s101
      %p105 = scmp.eq.s32.totalorder %s23, 0
      %p106 = por %p104, %p105
      %p107 = scmp.ne.s32.totalorder %s99, %s101
      %p108 = scmp.eq.s32.totalorder %s28, 1
      %p109 = por %p107, %p108
      %p110 = scmp.ne.s32.totalorder %s101, %s102
      %p111 = scmp.eq.s32.totalorder %s28, 0
      %p112 = por %p110, %p111
      %p113 = scmp.ne.s32.totalorder %s101, %s102
      %p114 = scmp.eq.s32.totalorder %s29, 1
      %p115 = por %p113, %p114
      %p117 = scmp.ne.s32.totalorder %s102, %s116
      %p118 = scmp.eq.s32.totalorder %s29, 0
      %p119 = por %p117, %p118
      %s121 = sadd.s32 %s120, 1
      %p124 = scmp.eq.s32.totalorder %s23, 1
      %p125 = scmp.ne.s32.totalorder %s120, %s122
      %p126 = scmp.eq.s32.totalorder %s23, 0
      %p127 = por %p125, %p126
      %p128 = scmp.ne.s32.totalorder %s120, %s122
      %p129 = scmp.eq.s32.totalorder %s28, 1
      %p130 = por %p128, %p129
      %p131 = scmp.ne.s32.totalorder %s122, %s123
      %p132 = scmp.eq.s32.totalorder %s28, 0
      %p133 = por %p131, %p132
      %p134 = scmp.ne.s32.totalorder %s122, %s123
      %p135 = scmp.eq.s32.totalorder %s29, 1
      %p136 = por %p134, %p135
      %p138 = scmp.ne.s32.totalorder %s123, %s137
      %p139 = scmp.eq.s32.totalorder %s29, 0
      %p140 = por %p138, %p139
      %s142 = sadd.s32 %s141, 1
      %p145 = scmp.eq.s32.totalorder %s23, 1
      %p146 = scmp.ne.s32.totalorder %s141, %s143
      %p147 = scmp.eq.s32.totalorder %s23, 0
      %p148 = por %p146, %p147
      %p149 = scmp.ne.s32.totalorder %s141, %s143
      %p150 = scmp.eq.s32.totalorder %s28, 1
      %p151 = por %p149, %p150
      %p152 = scmp.ne.s32.totalorder %s143, %s144
      %p153 = scmp.eq.s32.totalorder %s28, 0
      %p154 = por %p152, %p153
      %p155 = scmp.ne.s32.totalorder %s143, %s144
      %p156 = scmp.eq.s32.totalorder %s29, 1
      %p157 = por %p155, %p156
      %p159 = scmp.ne.s32.totalorder %s144, %s158
      %p160 = scmp.eq.s32.totalorder %s29, 0
      %p161 = por %p159, %p160
      %s163 = sadd.s32 %s162, 1
      %p166 = scmp.eq.s32.totalorder %s23, 1
      %p167 = scmp.ne.s32.totalorder %s162, %s164
      %p168 = scmp.eq.s32.totalorder %s23, 0
      %p169 = por %p167, %p168
      %p170 = scmp.ne.s32.totalorder %s162, %s164
      %p171 = scmp.eq.s32.totalorder %s28, 1
      %p172 = por %p170, %p171
      %p173 = scmp.ne.s32.totalorder %s164, %s165
      %p174 = scmp.eq.s32.totalorder %s28, 0
      %p175 = por %p173, %p174
      %p176 = scmp.ne.s32.totalorder %s164, %s165
      %p177 = scmp.eq.s32.totalorder %s29, 1
      %p178 = por %p176, %p177
      %p180 = scmp.ne.s32.totalorder %s165, %s179
      %p181 = scmp.eq.s32.totalorder %s29, 0
      %p182 = por %p180, %p181
      %s184 = sadd.s32 %s183, 1
      %p187 = scmp.eq.s32.totalorder %s23, 1
      %p188 = scmp.ne.s32.totalorder %s183, %s185
      %p189 = scmp.eq.s32.totalorder %s23, 0
      %p190 = por %p188, %p189
      %p191 = scmp.ne.s32.totalorder %s183, %s185
      %p192 = scmp.eq.s32.totalorder %s28, 1
      %p193 = por %p191, %p192
      %p194 = scmp.ne.s32.totalorder %s185, %s186
      %p195 = scmp.eq.s32.totalorder %s28, 0
      %p196 = por %p194, %p195
      %p197 = scmp.ne.s32.totalorder %s185, %s186
      %p198 = scmp.eq.s32.totalorder %s29, 1
      %p199 = por %p197, %p198
      %p201 = scmp.ne.s32.totalorder %s186, %s200
      %p202 = scmp.eq.s32.totalorder %s29, 0
      %p203 = por %p201, %p202
      %s205 = sadd.s32 %s204, 1
      %p208 = scmp.eq.s32.totalorder %s23, 1
      %p209 = scmp.ne.s32.totalorder %s204, %s206
      %p210 = scmp.eq.s32.totalorder %s23, 0
      %p211 = por %p209, %p210
      %p212 = scmp.ne.s32.totalorder %s204, %s206
      %p213 = scmp.eq.s32.totalorder %s28, 1
      %p214 = por %p212, %p213
      %p215 = scmp.ne.s32.totalorder %s206, %s207
      %p216 = scmp.eq.s32.totalorder %s28, 0
      %p217 = por %p215, %p216
      %p218 = scmp.ne.s32.totalorder %s206, %s207
      %p219 = scmp.eq.s32.totalorder %s29, 1
      %p220 = por %p218, %p219
      %p222 = scmp.ne.s32.totalorder %s207, %s221
      %p223 = scmp.eq.s32.totalorder %s29, 0
      %p224 = por %p222, %p223
      %s226 = sadd.s32 %s225, 1
      %p229 = scmp.eq.s32.totalorder %s23, 1
      %p230 = scmp.ne.s32.totalorder %s225, %s227
      %p231 = scmp.eq.s32.totalorder %s23, 0
      %p232 = por %p230, %p231
      %p233 = scmp.ne.s32.totalorder %s225, %s227
      %p234 = scmp.eq.s32.totalorder %s28, 1
      %p235 = por %p233, %p234
      %p236 = scmp.ne.s32.totalorder %s227, %s228
      %p237 = scmp.eq.s32.totalorder %s28, 0
      %p238 = por %p236, %p237
      %p239 = scmp.ne.s32.totalorder %s227, %s228
      %p240 = scmp.eq.s32.totalorder %s29, 1
      %p241 = por %p239, %p240
      %p243 = scmp.ne.s32.totalorder %s228, %s242
      %p244 = scmp.eq.s32.totalorder %s29, 0
      %p245 = por %p243, %p244
      %s247 = sadd.s32 %s246, 1
      %p250 = scmp.eq.s32.totalorder %s23, 1
      %p251 = scmp.ne.s32.totalorder %s246, %s248
      %p252 = scmp.eq.s32.totalorder %s23, 0
      %p253 = por %p251, %p252
      %p254 = scmp.ne.s32.totalorder %s246, %s248
      %p255 = scmp.eq.s32.totalorder %s28, 1
      %p256 = por %p254, %p255
      %p257 = scmp.ne.s32.totalorder %s248, %s249
      %p258 = scmp.eq.s32.totalorder %s28, 0
      %p259 = por %p257, %p258
      %p260 = scmp.ne.s32.totalorder %s248, %s249
      %p261 = scmp.eq.s32.totalorder %s29, 1
      %p262 = por %p260, %p261
      %p264 = scmp.ne.s32.totalorder %s249, %s263
      %p265 = scmp.eq.s32.totalorder %s29, 0
      %p266 = por %p264, %p265
      %s267 = ssub.s32 %s23, %s30
      %p268 = scmp.eq.s32.totalorder %s267, 0
      %s270 = sadd.s32 %s269, 1
      %s271 = scalar_select %p268, %s269, %s270
      %p274 = pneg %p268
      %p275 = scmp.eq.s32.totalorder %s23, 1
      %p276 = por %p274, %p275
      %p277 = scmp.ne.s32.totalorder %s269, %s272
      %p278 = scmp.eq.s32.totalorder %s23, 0
      %p279 = por %p277, %p278
      %p280 = scmp.ne.s32.totalorder %s269, %s272
      %p281 = scmp.eq.s32.totalorder %s28, 1
      %p282 = por %p280, %p281
      %p283 = scmp.ne.s32.totalorder %s272, %s273
      %p284 = scmp.eq.s32.totalorder %s28, 0
      %p285 = por %p283, %p284
      %p286 = scmp.ne.s32.totalorder %s272, %s273
      %p287 = scmp.eq.s32.totalorder %s29, 1
      %p288 = por %p286, %p287
      %p290 = scmp.ne.s32.totalorder %s273, %s289
      %p291 = scmp.eq.s32.totalorder %s29, 0
      %p292 = por %p290, %p291
      %p293 = scmp.le.s32.totalorder 1, %s23
      %p294 = scmp.lt.s32.totalorder %s23, 3
      %p295 = pnand %p293, %p294
      %p296 = pneg %p295
      // Predicated region
      $region9: #{tpu_custom_call.1} parent=5 // pred_check
        _
      $region10: #{tpu_custom_call.1} parent=5 // pred_check_branch
        %298 = sbr.rel (%p295) target = $region12
      $region11: #{tpu_custom_call.1} parent=5 // pred_region
        %s299 = ssub.s32 %s23, 1
        // Predicated region
        $region13: #{tpu_custom_call.1} parent=11 // pred_check
          %p300 = pneg %p70
        $region14: #{tpu_custom_call.1} parent=11 // pred_check_branch
          %302 = sbr.rel (%p300) target = $region16
        $region15: #{tpu_custom_call.1} parent=11 // pred_region
          _
        $region16: #{tpu_custom_call.1} parent=11 // pred_fallthru
          _
        // Predicated region
        $region17: #{tpu_custom_call.1} parent=11 // pred_check
          %p303 = pneg %p91
        $region18: #{tpu_custom_call.1} parent=11 // pred_check_branch
          %305 = sbr.rel (%p303) target = $region20
        $region19: #{tpu_custom_call.1} parent=11 // pred_region
          _
        $region20: #{tpu_custom_call.1} parent=11 // pred_fallthru
          _
        // Predicated region
        $region21: #{tpu_custom_call.1} parent=11 // pred_check
          %p306 = pneg %p112
        $region22: #{tpu_custom_call.1} parent=11 // pred_check_branch
          %308 = sbr.rel (%p306) target = $region24
        $region23: #{tpu_custom_call.1} parent=11 // pred_region
          _
        $region24: #{tpu_custom_call.1} parent=11 // pred_fallthru
          _
        // Predicated region
        $region25: #{tpu_custom_call.1} parent=11 // pred_check
          %p309 = pneg %p133
        $region26: #{tpu_custom_call.1} parent=11 // pred_check_branch
          %311 = sbr.rel (%p309) target = $region28
        $region27: #{tpu_custom_call.1} parent=11 // pred_region
          _
        $region28: #{tpu_custom_call.1} parent=11 // pred_fallthru
          _
        // Predicated region
        $region29: #{tpu_custom_call.1} parent=11 // pred_check
          %p312 = pneg %p154
        $region30: #{tpu_custom_call.1} parent=11 // pred_check_branch
          %314 = sbr.rel (%p312) target = $region32
        $region31: #{tpu_custom_call.1} parent=11 // pred_region
          _
        $region32: #{tpu_custom_call.1} parent=11 // pred_fallthru
          _
        // Predicated region
        $region33: #{tpu_custom_call.1} parent=11 // pred_check
          %p315 = pneg %p175
        $region34: #{tpu_custom_call.1} parent=11 // pred_check_branch
          %317 = sbr.rel (%p315) target = $region36
        $region35: #{tpu_custom_call.1} parent=11 // pred_region
          _
        $region36: #{tpu_custom_call.1} parent=11 // pred_fallthru
          _
        // Predicated region
        $region37: #{tpu_custom_call.1} parent=11 // pred_check
          %p318 = pneg %p196
        $region38: #{tpu_custom_call.1} parent=11 // pred_check_branch
          %320 = sbr.rel (%p318) target = $region40
        $region39: #{tpu_custom_call.1} parent=11 // pred_region
          _
        $region40: #{tpu_custom_call.1} parent=11 // pred_fallthru
          _
        // Predicated region
        $region41: #{tpu_custom_call.1} parent=11 // pred_check
          %p321 = pneg %p217
        $region42: #{tpu_custom_call.1} parent=11 // pred_check_branch
          %323 = sbr.rel (%p321) target = $region44
        $region43: #{tpu_custom_call.1} parent=11 // pred_region
          _
        $region44: #{tpu_custom_call.1} parent=11 // pred_fallthru
          _
        // Predicated region
        $region45: #{tpu_custom_call.1} parent=11 // pred_check
          %p324 = pneg %p238
        $region46: #{tpu_custom_call.1} parent=11 // pred_check_branch
          %326 = sbr.rel (%p324) target = $region48
        $region47: #{tpu_custom_call.1} parent=11 // pred_region
          _
        $region48: #{tpu_custom_call.1} parent=11 // pred_fallthru
          _
        // Predicated region
        $region49: #{tpu_custom_call.1} parent=11 // pred_check
          %p327 = pneg %p259
        $region50: #{tpu_custom_call.1} parent=11 // pred_check_branch
          %329 = sbr.rel (%p327) target = $region52
        $region51: #{tpu_custom_call.1} parent=11 // pred_region
          _
        $region52: #{tpu_custom_call.1} parent=11 // pred_fallthru
          _
      $region12: #{tpu_custom_call.1} parent=5 // pred_fallthru
        _
      %p330 = scmp.lt.s32.totalorder %s23, 2
      // Predicated region
      $region53: #{tpu_custom_call.1} parent=5 // pred_check
        %p331 = pneg %p330
      $region54: #{tpu_custom_call.1} parent=5 // pred_check_branch
        %333 = sbr.rel (%p331) target = $region56
      $region55: #{tpu_custom_call.1} parent=5 // pred_region
        // Predicated region
        $region57: #{tpu_custom_call.1} parent=55 // pred_check
          %p334 = pneg %p43
        $region58: #{tpu_custom_call.1} parent=55 // pred_check_branch
          %336 = sbr.rel (%p334) target = $region60
        $region59: #{tpu_custom_call.1} parent=55 // pred_region
          %s337 = sand.u32 %s33, 1
          %s338 = scalar_lea.sflag [#allocation3], %s337
          %s339 = sand.u32 %s33, 1
          %s340 = smul.addr %s339, 128
          %s341 = scalar_lea.vmem [#allocation2], %s340
          %s342 = smul.u32 4, %s23
          %344 = vsyncadd %s338, 0
          %s345 = smul.addr %s342, 8
          %s346 = smul.addr %s345, 4
          %s347 = scalar_lea.hbm %s0, %s346
          %s348 = sshll.u32 %s347, 4
          %s349 = int_to_ptr.hbm [resolvable:$true] %s348
          %s350 = sshll.u32 %s341, 4
          %s351 = int_to_ptr.vmem [resolvable:$true] %s350
          %356 = dma.hbm_to_vmem [thread:$0]  %s349, 2048, %s351, %s338, 64, 64, 4
        $region60: #{tpu_custom_call.1} parent=55 // pred_fallthru
          _
      $region56: #{tpu_custom_call.1} parent=5 // pred_fallthru
        _
      %p357 = scmp.le.s32.totalorder 1, %s23
      %p358 = scmp.lt.s32.totalorder %s23, 3
      %p359 = pnand %p357, %p358
      %p360 = pneg %p359
      // Predicated region
      $region61: #{tpu_custom_call.1} parent=5 // pred_check
        _
      $region62: #{tpu_custom_call.1} parent=5 // pred_check_branch
        %362 = sbr.rel (%p359) target = $region64
      $region63: #{tpu_custom_call.1} parent=5 // pred_region
        %s363 = ssub.s32 %s23, 1
        %s364 = sand.u32 %s36, 1
        %s365 = scalar_lea.sflag [#allocation3], %s364
        %s366 = sand.u32 %s36, 1
        %s367 = smul.addr %s366, 128
        %s368 = scalar_lea.vmem [#allocation2], %s367
        // Predicated region
        $region65: #{tpu_custom_call.1} parent=63 // pred_check
          %p369 = pneg %p49
        $region66: #{tpu_custom_call.1} parent=63 // pred_check_branch
          %371 = sbr.rel (%p369) target = $region68
        $region67: #{tpu_custom_call.1} parent=63 // pred_region
          %373 = dma.done %s365, 2048
        $region68: #{tpu_custom_call.1} parent=63 // pred_fallthru
          _
        %s374 = sand.u32 %s36, 1
        %s375 = scalar_lea.sflag [#allocation3], %s374
        %s376 = sand.u32 %s36, 1
        %s377 = smul.addr %s376, 128
        %s378 = scalar_lea.vmem [#allocation2], %s377
        %p379 = pneg %p49
        %p380 = pneg %p46
        %p381 = pneg %p70
        %p382 = pneg %p67
        %p383 = pneg %p91
        %p384 = pneg %p88
        %p385 = pneg %p112
        %p386 = pneg %p109
        %p387 = pneg %p133
        %p388 = pneg %p130
        %p389 = pneg %p154
        %p390 = pneg %p151
        %p391 = pneg %p175
        %p392 = pneg %p172
        %p393 = pneg %p196
        %p394 = pneg %p193
        %p395 = pneg %p217
        %p396 = pneg %p214
        %p397 = pneg %p238
        %p398 = pneg %p235
        %p399 = pneg %p259
        %p400 = pneg %p256
        %p401 = pneg %p285
        %p402 = pneg %p282
        %s403 = sand.u32 %s272, 1
        %s404 = scalar_lea.sflag [#allocation4], %s403
        %s405 = sand.u32 %s272, 1
        %s406 = smul.addr %s405, 4
        %s407 = scalar_lea.vmem [#allocation5], %s406
        %s408 = smul.u32 4, %s28
        %s409 = smul.u32 4, %s28
        %v411 = vld [vmem:[%s368] sm:$0xf]
        %v412 = vld [vmem:[%s368 + $0x4] sm:$0xf]
        %v413 = vld [vmem:[%s368 + $0x8] sm:$0xf]
        %v414 = vld [vmem:[%s368 + $0xc] sm:$0xf]
        %v415 = vld [vmem:[%s368 + $0x10] sm:$0xf]
        %v416 = vld [vmem:[%s368 + $0x14] sm:$0xf]
        %v417 = vld [vmem:[%s368 + $0x18] sm:$0xf]
        %v418 = vld [vmem:[%s368 + $0x1c] sm:$0xf]
        %v419 = vld [vmem:[%s368 + $0x20] sm:$0xf]
        %v420 = vld [vmem:[%s368 + $0x24] sm:$0xf]
        %v421 = vld [vmem:[%s368 + $0x28] sm:$0xf]
        %v422 = vld [vmem:[%s368 + $0x2c] sm:$0xf]
        %v423 = vld [vmem:[%s368 + $0x30] sm:$0xf]
        %v424 = vld [vmem:[%s368 + $0x34] sm:$0xf]
        %v425 = vld [vmem:[%s368 + $0x38] sm:$0xf]
        %v426 = vld [vmem:[%s368 + $0x3c] sm:$0xf]
        %v427 = vld [vmem:[%s368 + $0x40] sm:$0xf]
        %v428 = vld [vmem:[%s368 + $0x44] sm:$0xf]
        %v429 = vld [vmem:[%s368 + $0x48] sm:$0xf]
        %v430 = vld [vmem:[%s368 + $0x4c] sm:$0xf]
        %v431 = vld [vmem:[%s368 + $0x50] sm:$0xf]
        %v432 = vld [vmem:[%s368 + $0x54] sm:$0xf]
        %v433 = vld [vmem:[%s368 + $0x58] sm:$0xf]
        %v434 = vld [vmem:[%s368 + $0x5c] sm:$0xf]
        %v435 = vld [vmem:[%s368 + $0x60] sm:$0xf]
        %v436 = vld [vmem:[%s368 + $0x64] sm:$0xf]
        %v437 = vld [vmem:[%s368 + $0x68] sm:$0xf]
        %v438 = vld [vmem:[%s368 + $0x6c] sm:$0xf]
        %v439 = vld [vmem:[%s368 + $0x70] sm:$0xf]
        %v440 = vld [vmem:[%s368 + $0x74] sm:$0xf]
        %v441 = vld [vmem:[%s368 + $0x78] sm:$0xf]
        %v442 = vld [vmem:[%s368 + $0x7c] sm:$0xf]
        %v443 = vld [vmem:[%s1] sm:$0xf]
        %v444 = vld [vmem:[%s1 + $0x4] sm:$0xf]
        %v445 = vld [vmem:[%s1 + $0x8] sm:$0xf]
        %v446 = vld [vmem:[%s1 + $0xc] sm:$0xf]
        %v447 = vld [vmem:[%s1 + $0x10] sm:$0xf]
        %v448 = vld [vmem:[%s1 + $0x14] sm:$0xf]
        %v449 = vld [vmem:[%s1 + $0x18] sm:$0xf]
        %v450 = vld [vmem:[%s1 + $0x1c] sm:$0xf]
        %v451 = vld [vmem:[%s2] sm:$0x1]
        %v453 = vperm.slane %v451, 0
        %v487 = vunpack.c.l.b16 %v411
        %v488 = vunpack.c.l.b16 %v412
        %v489 = vunpack.c.l.b16 %v413
        %v490 = vunpack.c.l.b16 %v414
        %v491 = vunpack.c.l.b16 %v415
        %v492 = vunpack.c.l.b16 %v416
        %v493 = vunpack.c.l.b16 %v417
        %v494 = vunpack.c.l.b16 %v418
        %v495 = vunpack.c.l.b16 %v419
        %v496 = vunpack.c.l.b16 %v420
        %v497 = vunpack.c.l.b16 %v421
        %v498 = vunpack.c.l.b16 %v422
        %v499 = vunpack.c.l.b16 %v423
        %v500 = vunpack.c.l.b16 %v424
        %v501 = vunpack.c.l.b16 %v425
        %v502 = vunpack.c.l.b16 %v426
        %v503 = vunpack.c.l.b16 %v427
        %v504 = vunpack.c.l.b16 %v428
        %v505 = vunpack.c.l.b16 %v429
        %v506 = vunpack.c.l.b16 %v430
        %v507 = vunpack.c.l.b16 %v431
        %v508 = vunpack.c.l.b16 %v432
        %v509 = vunpack.c.l.b16 %v433
        %v510 = vunpack.c.l.b16 %v434
        %v511 = vunpack.c.l.b16 %v435
        %v512 = vunpack.c.l.b16 %v436
        %v513 = vunpack.c.l.b16 %v437
        %v514 = vunpack.c.l.b16 %v438
        %v515 = vunpack.c.l.b16 %v439
        %v516 = vunpack.c.l.b16 %v440
        %v517 = vunpack.c.l.b16 %v441
        %v518 = vunpack.c.l.b16 %v442
        %v519 = vpack.c.b16 %v488, %v487
        %v520 = vpack.c.b16 %v490, %v489
        %v521 = vpack.c.b16 %v492, %v491
        %v522 = vpack.c.b16 %v494, %v493
        %v523 = vpack.c.b16 %v496, %v495
        %v524 = vpack.c.b16 %v498, %v497
        %v525 = vpack.c.b16 %v500, %v499
        %v526 = vpack.c.b16 %v502, %v501
        %v527 = vpack.c.b16 %v504, %v503
        %v528 = vpack.c.b16 %v506, %v505
        %v529 = vpack.c.b16 %v508, %v507
        %v530 = vpack.c.b16 %v510, %v509
        %v531 = vpack.c.b16 %v512, %v511
        %v532 = vpack.c.b16 %v514, %v513
        %v533 = vpack.c.b16 %v516, %v515
        %v534 = vpack.c.b16 %v518, %v517
        %v543 = vunpack.c.l.b16 %v443
        %v544 = vunpack.c.l.b16 %v444
        %v545 = vunpack.c.l.b16 %v445
        %v546 = vunpack.c.l.b16 %v446
        %v547 = vunpack.c.l.b16 %v447
        %v548 = vunpack.c.l.b16 %v448
        %v549 = vunpack.c.l.b16 %v449
        %v550 = vunpack.c.l.b16 %v450
        %v551 = vpack.c.b16 %v544, %v543
        %v552 = vpack.c.b16 %v546, %v545
        %v553 = vpack.c.b16 %v548, %v547
        %v554 = vpack.c.b16 %v550, %v549
        %vm559 = vcmask 523264
        %v561 = vsel %vm559, %v519, 0
        %v564 = vsel %vm559, %v520, 0
        %v567 = vsel %vm559, %v521, 0
        %v570 = vsel %vm559, %v522, 0
        %v573 = vsel %vm559, %v523, 0
        %v576 = vsel %vm559, %v524, 0
        %v579 = vsel %vm559, %v525, 0
        %v582 = vsel %vm559, %v526, 0
        %v585 = vsel %vm559, %v527, 0
        %v588 = vsel %vm559, %v528, 0
        %v591 = vsel %vm559, %v529, 0
        %v594 = vsel %vm559, %v530, 0
        %v597 = vsel %vm559, %v531, 0
        %v600 = vsel %vm559, %v532, 0
        %v603 = vsel %vm559, %v533, 0
        %v606 = vsel %vm559, %v534, 0
        %608 = vmatpush.bf16.msra.mxu0 0
        %609 = vmatpush.bf16.msra.mxu0 0
        %610 = vmatpush.bf16.msra.mxu0 0
        %611 = vmatpush.bf16.msra.mxu0 0
        %612 = vmatpush.bf16.msra.mxu0 %v554
        %613 = vmatpush.bf16.msra.mxu0 %v553
        %614 = vmatpush.bf16.msra.mxu0 %v552
        %615 = vmatpush.bf16.msra.mxu0 %v551
        %616 = vmatmul.bf16.gmra.mxu0 %v561
        %v617 = vpop.f32.mrf.mxu0
        %v618 = vadd.f32 %v453, %v617
        %v619 = vpop.f32.mrf.mxu0
        %v620 = vadd.f32 %v453, %v619
        %621 = vmatmul.bf16.gmra.mxu0 %v564
        %v622 = vpop.f32.mrf.mxu0
        %v623 = vadd.f32 %v453, %v622
        %v624 = vpop.f32.mrf.mxu0
        %v625 = vadd.f32 %v453, %v624
        %626 = vmatmul.bf16.gmra.mxu0 %v567
        %v627 = vpop.f32.mrf.mxu0
        %v628 = vadd.f32 %v453, %v627
        %v629 = vpop.f32.mrf.mxu0
        %v630 = vadd.f32 %v453, %v629
        %631 = vmatmul.bf16.gmra.mxu0 %v570
        %v632 = vpop.f32.mrf.mxu0
        %v633 = vadd.f32 %v453, %v632
        %v634 = vpop.f32.mrf.mxu0
        %v635 = vadd.f32 %v453, %v634
        %636 = vmatmul.bf16.gmra.mxu0 %v573
        %v637 = vpop.f32.mrf.mxu0
        %v638 = vadd.f32 %v453, %v637
        %v639 = vpop.f32.mrf.mxu0
        %v640 = vadd.f32 %v453, %v639
        %641 = vmatmul.bf16.gmra.mxu0 %v576
        %v642 = vpop.f32.mrf.mxu0
        %v643 = vadd.f32 %v453, %v642
        %v644 = vpop.f32.mrf.mxu0
        %v645 = vadd.f32 %v453, %v644
        %646 = vmatmul.bf16.gmra.mxu0 %v579
        %v647 = vpop.f32.mrf.mxu0
        %v648 = vadd.f32 %v453, %v647
        %v649 = vpop.f32.mrf.mxu0
        %v650 = vadd.f32 %v453, %v649
        %651 = vmatmul.bf16.gmra.mxu0 %v582
        %v652 = vpop.f32.mrf.mxu0
        %v653 = vadd.f32 %v453, %v652
        %v654 = vpop.f32.mrf.mxu0
        %v655 = vadd.f32 %v453, %v654
        %656 = vmatmul.bf16.gmra.mxu0 %v585
        %v657 = vpop.f32.mrf.mxu0
        %v658 = vadd.f32 %v453, %v657
        %v659 = vpop.f32.mrf.mxu0
        %v660 = vadd.f32 %v453, %v659
        %661 = vmatmul.bf16.gmra.mxu0 %v588
        %v662 = vpop.f32.mrf.mxu0
        %v663 = vadd.f32 %v453, %v662
        %v664 = vpop.f32.mrf.mxu0
        %v665 = vadd.f32 %v453, %v664
        %666 = vmatmul.bf16.gmra.mxu0 %v591
        %v667 = vpop.f32.mrf.mxu0
        %v668 = vadd.f32 %v453, %v667
        %v669 = vpop.f32.mrf.mxu0
        %v670 = vadd.f32 %v453, %v669
        %671 = vmatmul.bf16.gmra.mxu0 %v594
        %v672 = vpop.f32.mrf.mxu0
        %v673 = vadd.f32 %v453, %v672
        %v674 = vpop.f32.mrf.mxu0
        %v675 = vadd.f32 %v453, %v674
        %676 = vmatmul.bf16.gmra.mxu0 %v597
        %v677 = vpop.f32.mrf.mxu0
        %v678 = vadd.f32 %v453, %v677
        %v679 = vpop.f32.mrf.mxu0
        %v680 = vadd.f32 %v453, %v679
        %681 = vmatmul.bf16.gmra.mxu0 %v600
        %v682 = vpop.f32.mrf.mxu0
        %v683 = vadd.f32 %v453, %v682
        %v684 = vpop.f32.mrf.mxu0
        %v685 = vadd.f32 %v453, %v684
        %686 = vmatmul.bf16.gmra.mxu0 %v603
        %v687 = vpop.f32.mrf.mxu0
        %v688 = vadd.f32 %v453, %v687
        %v689 = vpop.f32.mrf.mxu0
        %v690 = vadd.f32 %v453, %v689
        %691 = vmatmul.bf16.gmra.mxu0 %v606
        %v692 = vpop.f32.mrf.mxu0
        %v693 = vadd.f32 %v453, %v692
        %v694 = vpop.f32.mrf.mxu0
        %v695 = vadd.f32 %v453, %v694
        %696 = vdwg.mxu0
        %v697 = vld [vmem:[%s3] sm:$0xf]
        %v698 = vld [vmem:[%s3 + $0x4] sm:$0xf]
        %v699 = vld [vmem:[%s3 + $0x8] sm:$0xf]
        %v700 = vld [vmem:[%s3 + $0xc] sm:$0xf]
        %v701 = vld [vmem:[%s3 + $0x10] sm:$0xf]
        %v702 = vld [vmem:[%s3 + $0x14] sm:$0xf]
        %v703 = vld [vmem:[%s3 + $0x18] sm:$0xf]
        %v704 = vld [vmem:[%s3 + $0x1c] sm:$0xf]
        %v705 = vld [vmem:[%s4] sm:$0x1]
        %v707 = vperm.slane %v705, 0
        %v717 = vunpack.c.l.b16 %v697
        %v718 = vunpack.c.l.b16 %v698
        %v719 = vunpack.c.l.b16 %v699
        %v720 = vunpack.c.l.b16 %v700
        %v721 = vunpack.c.l.b16 %v701
        %v722 = vunpack.c.l.b16 %v702
        %v723 = vunpack.c.l.b16 %v703
        %v724 = vunpack.c.l.b16 %v704
        %v725 = vpack.c.b16 %v718, %v717
        %v726 = vpack.c.b16 %v720, %v719
        %v727 = vpack.c.b16 %v722, %v721
        %v728 = vpack.c.b16 %v724, %v723
        %733 = vmatpush.bf16.msra.mxu0 0
        %734 = vmatpush.bf16.msra.mxu0 0
        %735 = vmatpush.bf16.msra.mxu0 0
        %736 = vmatpush.bf16.msra.mxu0 0
        %737 = vmatpush.bf16.msra.mxu0 %v728
        %738 = vmatpush.bf16.msra.mxu0 %v727
        %739 = vmatpush.bf16.msra.mxu0 %v726
        %740 = vmatpush.bf16.msra.mxu0 %v725
        %741 = vmatmul.bf16.gmra.mxu0 %v561
        %v742 = vpop.f32.mrf.mxu0
        %v743 = vadd.f32 %v707, %v742
        %v744 = vpop.f32.mrf.mxu0
        %v745 = vadd.f32 %v707, %v744
        %746 = vmatmul.bf16.gmra.mxu0 %v564
        %v747 = vpop.f32.mrf.mxu0
        %v748 = vadd.f32 %v707, %v747
        %v749 = vpop.f32.mrf.mxu0
        %v750 = vadd.f32 %v707, %v749
        %751 = vmatmul.bf16.gmra.mxu0 %v567
        %v752 = vpop.f32.mrf.mxu0
        %v753 = vadd.f32 %v707, %v752
        %v754 = vpop.f32.mrf.mxu0
        %v755 = vadd.f32 %v707, %v754
        %756 = vmatmul.bf16.gmra.mxu0 %v570
        %v757 = vpop.f32.mrf.mxu0
        %v758 = vadd.f32 %v707, %v757
        %v759 = vpop.f32.mrf.mxu0
        %v760 = vadd.f32 %v707, %v759
        %761 = vmatmul.bf16.gmra.mxu0 %v573
        %v762 = vpop.f32.mrf.mxu0
        %v763 = vadd.f32 %v707, %v762
        %v764 = vpop.f32.mrf.mxu0
        %v765 = vadd.f32 %v707, %v764
        %766 = vmatmul.bf16.gmra.mxu0 %v576
        %v767 = vpop.f32.mrf.mxu0
        %v768 = vadd.f32 %v707, %v767
        %v769 = vpop.f32.mrf.mxu0
        %v770 = vadd.f32 %v707, %v769
        %771 = vmatmul.bf16.gmra.mxu0 %v579
        %v772 = vpop.f32.mrf.mxu0
        %v773 = vadd.f32 %v707, %v772
        %v774 = vpop.f32.mrf.mxu0
        %v775 = vadd.f32 %v707, %v774
        %776 = vmatmul.bf16.gmra.mxu0 %v582
        %v777 = vpop.f32.mrf.mxu0
        %v778 = vadd.f32 %v707, %v777
        %v779 = vpop.f32.mrf.mxu0
        %v780 = vadd.f32 %v707, %v779
        %781 = vmatmul.bf16.gmra.mxu0 %v585
        %v782 = vpop.f32.mrf.mxu0
        %v783 = vadd.f32 %v707, %v782
        %v784 = vpop.f32.mrf.mxu0
        %v785 = vadd.f32 %v707, %v784
        %786 = vmatmul.bf16.gmra.mxu0 %v588
        %v787 = vpop.f32.mrf.mxu0
        %v788 = vadd.f32 %v707, %v787
        %v789 = vpop.f32.mrf.mxu0
        %v790 = vadd.f32 %v707, %v789
        %791 = vmatmul.bf16.gmra.mxu0 %v591
        %v792 = vpop.f32.mrf.mxu0
        %v793 = vadd.f32 %v707, %v792
        %v794 = vpop.f32.mrf.mxu0
        %v795 = vadd.f32 %v707, %v794
        %796 = vmatmul.bf16.gmra.mxu0 %v594
        %v797 = vpop.f32.mrf.mxu0
        %v798 = vadd.f32 %v707, %v797
        %v799 = vpop.f32.mrf.mxu0
        %v800 = vadd.f32 %v707, %v799
        %801 = vmatmul.bf16.gmra.mxu0 %v597
        %v802 = vpop.f32.mrf.mxu0
        %v803 = vadd.f32 %v707, %v802
        %v804 = vpop.f32.mrf.mxu0
        %v805 = vadd.f32 %v707, %v804
        %806 = vmatmul.bf16.gmra.mxu0 %v600
        %v807 = vpop.f32.mrf.mxu0
        %v808 = vadd.f32 %v707, %v807
        %v809 = vpop.f32.mrf.mxu0
        %v810 = vadd.f32 %v707, %v809
        %811 = vmatmul.bf16.gmra.mxu0 %v603
        %v812 = vpop.f32.mrf.mxu0
        %v813 = vadd.f32 %v707, %v812
        %v814 = vpop.f32.mrf.mxu0
        %v815 = vadd.f32 %v707, %v814
        %816 = vmatmul.bf16.gmra.mxu0 %v606
        %v817 = vpop.f32.mrf.mxu0
        %v818 = vadd.f32 %v707, %v817
        %v819 = vpop.f32.mrf.mxu0
        %v820 = vadd.f32 %v707, %v819
        %821 = vdwg.mxu0
        %v822 = vld [vmem:[%s5] sm:$0xf]
        %v823 = vld [vmem:[%s5 + $0x4] sm:$0xf]
        %v824 = vld [vmem:[%s5 + $0x8] sm:$0xf]
        %v825 = vld [vmem:[%s5 + $0xc] sm:$0xf]
        %v826 = vld [vmem:[%s5 + $0x10] sm:$0xf]
        %v827 = vld [vmem:[%s5 + $0x14] sm:$0xf]
        %v828 = vld [vmem:[%s5 + $0x18] sm:$0xf]
        %v829 = vld [vmem:[%s5 + $0x1c] sm:$0xf]
        %v830 = vld [vmem:[%s6] sm:$0x1]
        %v832 = vperm.slane %v830, 0
        %v842 = vunpack.c.l.b16 %v822
        %v843 = vunpack.c.l.b16 %v823
        %v844 = vunpack.c.l.b16 %v824
        %v845 = vunpack.c.l.b16 %v825
        %v846 = vunpack.c.l.b16 %v826
        %v847 = vunpack.c.l.b16 %v827
        %v848 = vunpack.c.l.b16 %v828
        %v849 = vunpack.c.l.b16 %v829
        %v850 = vpack.c.b16 %v843, %v842
        %v851 = vpack.c.b16 %v845, %v844
        %v852 = vpack.c.b16 %v847, %v846
        %v853 = vpack.c.b16 %v849, %v848
        %858 = vmatpush.bf16.msra.mxu0 0
        %859 = vmatpush.bf16.msra.mxu0 0
        %860 = vmatpush.bf16.msra.mxu0 0
        %861 = vmatpush.bf16.msra.mxu0 0
        %862 = vmatpush.bf16.msra.mxu0 %v853
        %863 = vmatpush.bf16.msra.mxu0 %v852
        %864 = vmatpush.bf16.msra.mxu0 %v851
        %865 = vmatpush.bf16.msra.mxu0 %v850
        %866 = vmatmul.bf16.gmra.mxu0 %v561
        %v867 = vpop.f32.mrf.mxu0
        %v868 = vadd.f32 %v832, %v867
        %v869 = vpop.f32.mrf.mxu0
        %v870 = vadd.f32 %v832, %v869
        %871 = vmatmul.bf16.gmra.mxu0 %v564
        %v872 = vpop.f32.mrf.mxu0
        %v873 = vadd.f32 %v832, %v872
        %v874 = vpop.f32.mrf.mxu0
        %v875 = vadd.f32 %v832, %v874
        %876 = vmatmul.bf16.gmra.mxu0 %v567
        %v877 = vpop.f32.mrf.mxu0
        %v878 = vadd.f32 %v832, %v877
        %v879 = vpop.f32.mrf.mxu0
        %v880 = vadd.f32 %v832, %v879
        %881 = vmatmul.bf16.gmra.mxu0 %v570
        %v882 = vpop.f32.mrf.mxu0
        %v883 = vadd.f32 %v832, %v882
        %v884 = vpop.f32.mrf.mxu0
        %v885 = vadd.f32 %v832, %v884
        %886 = vmatmul.bf16.gmra.mxu0 %v573
        %v887 = vpop.f32.mrf.mxu0
        %v888 = vadd.f32 %v832, %v887
        %v889 = vpop.f32.mrf.mxu0
        %v890 = vadd.f32 %v832, %v889
        %891 = vmatmul.bf16.gmra.mxu0 %v576
        %v892 = vpop.f32.mrf.mxu0
        %v893 = vadd.f32 %v832, %v892
        %v894 = vpop.f32.mrf.mxu0
        %v895 = vadd.f32 %v832, %v894
        %896 = vmatmul.bf16.gmra.mxu0 %v579
        %v897 = vpop.f32.mrf.mxu0
        %v898 = vadd.f32 %v832, %v897
        %v899 = vpop.f32.mrf.mxu0
        %v900 = vadd.f32 %v832, %v899
        %901 = vmatmul.bf16.gmra.mxu0 %v582
        %v902 = vpop.f32.mrf.mxu0
        %v903 = vadd.f32 %v832, %v902
        %v904 = vpop.f32.mrf.mxu0
        %v905 = vadd.f32 %v832, %v904
        %906 = vmatmul.bf16.gmra.mxu0 %v585
        %v907 = vpop.f32.mrf.mxu0
        %v908 = vadd.f32 %v832, %v907
        %v909 = vpop.f32.mrf.mxu0
        %v910 = vadd.f32 %v832, %v909
        %911 = vmatmul.bf16.gmra.mxu0 %v588
        %v912 = vpop.f32.mrf.mxu0
        %v913 = vadd.f32 %v832, %v912
        %v914 = vpop.f32.mrf.mxu0
        %v915 = vadd.f32 %v832, %v914
        %916 = vmatmul.bf16.gmra.mxu0 %v591
        %v917 = vpop.f32.mrf.mxu0
        %v918 = vadd.f32 %v832, %v917
        %v919 = vpop.f32.mrf.mxu0
        %v920 = vadd.f32 %v832, %v919
        %921 = vmatmul.bf16.gmra.mxu0 %v594
        %v922 = vpop.f32.mrf.mxu0
        %v923 = vadd.f32 %v832, %v922
        %v924 = vpop.f32.mrf.mxu0
        %v925 = vadd.f32 %v832, %v924
        %926 = vmatmul.bf16.gmra.mxu0 %v597
        %v927 = vpop.f32.mrf.mxu0
        %v928 = vadd.f32 %v832, %v927
        %v929 = vpop.f32.mrf.mxu0
        %v930 = vadd.f32 %v832, %v929
        %931 = vmatmul.bf16.gmra.mxu0 %v600
        %v932 = vpop.f32.mrf.mxu0
        %v933 = vadd.f32 %v832, %v932
        %v934 = vpop.f32.mrf.mxu0
        %v935 = vadd.f32 %v832, %v934
        %936 = vmatmul.bf16.gmra.mxu0 %v603
        %v937 = vpop.f32.mrf.mxu0
        %v938 = vadd.f32 %v832, %v937
        %v939 = vpop.f32.mrf.mxu0
        %v940 = vadd.f32 %v832, %v939
        %941 = vmatmul.bf16.gmra.mxu0 %v606
        %v942 = vpop.f32.mrf.mxu0
        %v943 = vadd.f32 %v832, %v942
        %v944 = vpop.f32.mrf.mxu0
        %v945 = vadd.f32 %v832, %v944
        %946 = vdwg.mxu0
        %v947 = vpack.c.bf16 %v618, %v618
        %v948 = vpack.c.bf16 %v620, %v620
        %v949 = vpack.c.bf16 %v623, %v623
        %v950 = vpack.c.bf16 %v625, %v625
        %v951 = vpack.c.bf16 %v628, %v628
        %v952 = vpack.c.bf16 %v630, %v630
        %v953 = vpack.c.bf16 %v633, %v633
        %v954 = vpack.c.bf16 %v635, %v635
        %v955 = vpack.c.bf16 %v638, %v638
        %v956 = vpack.c.bf16 %v640, %v640
        %v957 = vpack.c.bf16 %v643, %v643
        %v958 = vpack.c.bf16 %v645, %v645
        %v959 = vpack.c.bf16 %v648, %v648
        %v960 = vpack.c.bf16 %v650, %v650
        %v961 = vpack.c.bf16 %v653, %v653
        %v962 = vpack.c.bf16 %v655, %v655
        %v963 = vpack.c.bf16 %v658, %v658
        %v964 = vpack.c.bf16 %v660, %v660
        %v965 = vpack.c.bf16 %v663, %v663
        %v966 = vpack.c.bf16 %v665, %v665
        %v967 = vpack.c.bf16 %v668, %v668
        %v968 = vpack.c.bf16 %v670, %v670
        %v969 = vpack.c.bf16 %v673, %v673
        %v970 = vpack.c.bf16 %v675, %v675
        %v971 = vpack.c.bf16 %v678, %v678
        %v972 = vpack.c.bf16 %v680, %v680
        %v973 = vpack.c.bf16 %v683, %v683
        %v974 = vpack.c.bf16 %v685, %v685
        %v975 = vpack.c.bf16 %v688, %v688
        %v976 = vpack.c.bf16 %v690, %v690
        %v977 = vpack.c.bf16 %v693, %v693
        %v978 = vpack.c.bf16 %v695, %v695
        %v979 = vpack.c.bf16 %v743, %v743
        %v980 = vpack.c.bf16 %v745, %v745
        %v981 = vpack.c.bf16 %v748, %v748
        %v982 = vpack.c.bf16 %v750, %v750
        %v983 = vpack.c.bf16 %v753, %v753
        %v984 = vpack.c.bf16 %v755, %v755
        %v985 = vpack.c.bf16 %v758, %v758
        %v986 = vpack.c.bf16 %v760, %v760
        %v987 = vpack.c.bf16 %v763, %v763
        %v988 = vpack.c.bf16 %v765, %v765
        %v989 = vpack.c.bf16 %v768, %v768
        %v990 = vpack.c.bf16 %v770, %v770
        %v991 = vpack.c.bf16 %v773, %v773
        %v992 = vpack.c.bf16 %v775, %v775
        %v993 = vpack.c.bf16 %v778, %v778
        %v994 = vpack.c.bf16 %v780, %v780
        %v995 = vpack.c.bf16 %v783, %v783
        %v996 = vpack.c.bf16 %v785, %v785
        %v997 = vpack.c.bf16 %v788, %v788
        %v998 = vpack.c.bf16 %v790, %v790
        %v999 = vpack.c.bf16 %v793, %v793
        %v1000 = vpack.c.bf16 %v795, %v795
        %v1001 = vpack.c.bf16 %v798, %v798
        %v1002 = vpack.c.bf16 %v800, %v800
        %v1003 = vpack.c.bf16 %v803, %v803
        %v1004 = vpack.c.bf16 %v805, %v805
        %v1005 = vpack.c.bf16 %v808, %v808
        %v1006 = vpack.c.bf16 %v810, %v810
        %v1007 = vpack.c.bf16 %v813, %v813
        %v1008 = vpack.c.bf16 %v815, %v815
        %v1009 = vpack.c.bf16 %v818, %v818
        %v1010 = vpack.c.bf16 %v820, %v820
        %v1011 = vpack.c.bf16 %v868, %v868
        %v1012 = vpack.c.bf16 %v870, %v870
        %v1013 = vpack.c.bf16 %v873, %v873
        %v1014 = vpack.c.bf16 %v875, %v875
        %v1015 = vpack.c.bf16 %v878, %v878
        %v1016 = vpack.c.bf16 %v880, %v880
        %v1017 = vpack.c.bf16 %v883, %v883
        %v1018 = vpack.c.bf16 %v885, %v885
        %v1019 = vpack.c.bf16 %v888, %v888
        %v1020 = vpack.c.bf16 %v890, %v890
        %v1021 = vpack.c.bf16 %v893, %v893
        %v1022 = vpack.c.bf16 %v895, %v895
        %v1023 = vpack.c.bf16 %v898, %v898
        %v1024 = vpack.c.bf16 %v900, %v900
        %v1025 = vpack.c.bf16 %v903, %v903
        %v1026 = vpack.c.bf16 %v905, %v905
        %v1027 = vpack.c.bf16 %v908, %v908
        %v1028 = vpack.c.bf16 %v910, %v910
        %v1029 = vpack.c.bf16 %v913, %v913
        %v1030 = vpack.c.bf16 %v915, %v915
        %v1031 = vpack.c.bf16 %v918, %v918
        %v1032 = vpack.c.bf16 %v920, %v920
        %v1033 = vpack.c.bf16 %v923, %v923
        %v1034 = vpack.c.bf16 %v925, %v925
        %v1035 = vpack.c.bf16 %v928, %v928
        %v1036 = vpack.c.bf16 %v930, %v930
        %v1037 = vpack.c.bf16 %v933, %v933
        %v1038 = vpack.c.bf16 %v935, %v935
        %v1039 = vpack.c.bf16 %v938, %v938
        %v1040 = vpack.c.bf16 %v940, %v940
        %v1041 = vpack.c.bf16 %v943, %v943
        %v1042 = vpack.c.bf16 %v945, %v945
        %v1051 = vunpack.c.l.b16 %v979
        %v1052 = vunpack.c.l.b16 %v980
        %v1053 = vunpack.c.l.b16 %v981
        %v1054 = vunpack.c.l.b16 %v982
        %v1055 = vunpack.c.l.b16 %v983
        %v1056 = vunpack.c.l.b16 %v984
        %v1057 = vunpack.c.l.b16 %v985
        %v1058 = vunpack.c.l.b16 %v986
        %v1059 = vpack.c.b16 %v1052, %v1051
        %v1060 = vpack.c.b16 %v1054, %v1053
        %v1061 = vpack.c.b16 %v1056, %v1055
        %v1062 = vpack.c.b16 %v1058, %v1057
        %v1071 = vunpack.c.l.b16 %v1011
        %v1072 = vunpack.c.l.b16 %v1012
        %v1073 = vunpack.c.l.b16 %v1013
        %v1074 = vunpack.c.l.b16 %v1014
        %v1075 = vunpack.c.l.b16 %v1015
        %v1076 = vunpack.c.l.b16 %v1016
        %v1077 = vunpack.c.l.b16 %v1017
        %v1078 = vunpack.c.l.b16 %v1018
        %v1079 = vpack.c.b16 %v1072, %v1071
        %v1080 = vpack.c.b16 %v1074, %v1073
        %v1081 = vpack.c.b16 %v1076, %v1075
        %v1082 = vpack.c.b16 %v1078, %v1077
        %vm1083 = vcmask 261120
        %v1085 = vsel %vm1083, %v1059, 0
        %v1088 = vsel %vm1083, %v1060, 0
        %v1091 = vsel %vm1083, %v1061, 0
        %v1094 = vsel %vm1083, %v1062, 0
        %v1097 = vsel %vm1083, %v1079, 0
        %v1100 = vsel %vm1083, %v1080, 0
        %v1103 = vsel %vm1083, %v1081, 0
        %v1106 = vsel %vm1083, %v1082, 0
        %1108 = vmatpush.bf16.xpose.msra.mxu0 0
        %1109 = vmatpush.bf16.xpose.msra.mxu0 0
        %1110 = vmatpush.bf16.xpose.msra.mxu0 0
        %1111 = vmatpush.bf16.xpose.msra.mxu0 0
        %1112 = vmatpush.bf16.xpose.msra.mxu0 %v1106
        %1113 = vmatpush.bf16.xpose.msra.mxu0 %v1103
        %1114 = vmatpush.bf16.xpose.msra.mxu0 %v1100
        %1115 = vmatpush.bf16.xpose.msra.mxu0 %v1097
        %1116 = vmatmul.bf16.gmra.mxu0 %v1085
        %v1117 = vpop.f32.mrf.mxu0
        %v1118 = vadd.f32 0.0, %v1117
        %v1119 = vpop.f32.mrf.mxu0
        %v1120 = vadd.f32 0.0, %v1119
        %1121 = vmatmul.bf16.gmra.mxu0 %v1088
        %v1122 = vpop.f32.mrf.mxu0
        %v1123 = vadd.f32 0.0, %v1122
        %v1124 = vpop.f32.mrf.mxu0
        %v1125 = vadd.f32 0.0, %v1124
        %1126 = vmatmul.bf16.gmra.mxu0 %v1091
        %v1127 = vpop.f32.mrf.mxu0
        %v1128 = vadd.f32 0.0, %v1127
        %v1129 = vpop.f32.mrf.mxu0
        %v1130 = vadd.f32 0.0, %v1129
        %1131 = vmatmul.bf16.gmra.mxu0 %v1094
        %v1132 = vpop.f32.mrf.mxu0
        %v1133 = vadd.f32 0.0, %v1132
        %v1134 = vpop.f32.mrf.mxu0
        %v1135 = vadd.f32 0.0, %v1134
        %1136 = vdwg.mxu0
        %v1145 = vunpack.c.l.b16 %v987
        %v1146 = vunpack.c.l.b16 %v988
        %v1147 = vunpack.c.l.b16 %v989
        %v1148 = vunpack.c.l.b16 %v990
        %v1149 = vunpack.c.l.b16 %v991
        %v1150 = vunpack.c.l.b16 %v992
        %v1151 = vunpack.c.l.b16 %v993
        %v1152 = vunpack.c.l.b16 %v994
        %v1153 = vpack.c.b16 %v1146, %v1145
        %v1154 = vpack.c.b16 %v1148, %v1147
        %v1155 = vpack.c.b16 %v1150, %v1149
        %v1156 = vpack.c.b16 %v1152, %v1151
        %v1165 = vunpack.c.l.b16 %v1019
        %v1166 = vunpack.c.l.b16 %v1020
        %v1167 = vunpack.c.l.b16 %v1021
        %v1168 = vunpack.c.l.b16 %v1022
        %v1169 = vunpack.c.l.b16 %v1023
        %v1170 = vunpack.c.l.b16 %v1024
        %v1171 = vunpack.c.l.b16 %v1025
        %v1172 = vunpack.c.l.b16 %v1026
        %v1173 = vpack.c.b16 %v1166, %v1165
        %v1174 = vpack.c.b16 %v1168, %v1167
        %v1175 = vpack.c.b16 %v1170, %v1169
        %v1176 = vpack.c.b16 %v1172, %v1171
        %v1178 = vsel %vm1083, %v1153, 0
        %v1181 = vsel %vm1083, %v1154, 0
        %v1184 = vsel %vm1083, %v1155, 0
        %v1187 = vsel %vm1083, %v1156, 0
        %v1190 = vsel %vm1083, %v1173, 0
        %v1193 = vsel %vm1083, %v1174, 0
        %v1196 = vsel %vm1083, %v1175, 0
        %v1199 = vsel %vm1083, %v1176, 0
        %1201 = vmatpush.bf16.xpose.msra.mxu0 0
        %1202 = vmatpush.bf16.xpose.msra.mxu0 0
        %1203 = vmatpush.bf16.xpose.msra.mxu0 0
        %1204 = vmatpush.bf16.xpose.msra.mxu0 0
        %1205 = vmatpush.bf16.xpose.msra.mxu0 %v1199
        %1206 = vmatpush.bf16.xpose.msra.mxu0 %v1196
        %1207 = vmatpush.bf16.xpose.msra.mxu0 %v1193
        %1208 = vmatpush.bf16.xpose.msra.mxu0 %v1190
        %1209 = vmatmul.bf16.gmra.mxu0 %v1178
        %v1210 = vpop.f32.mrf.mxu0
        %v1211 = vadd.f32 0.0, %v1210
        %v1212 = vpop.f32.mrf.mxu0
        %v1213 = vadd.f32 0.0, %v1212
        %1214 = vmatmul.bf16.gmra.mxu0 %v1181
        %v1215 = vpop.f32.mrf.mxu0
        %v1216 = vadd.f32 0.0, %v1215
        %v1217 = vpop.f32.mrf.mxu0
        %v1218 = vadd.f32 0.0, %v1217
        %1219 = vmatmul.bf16.gmra.mxu0 %v1184
        %v1220 = vpop.f32.mrf.mxu0
        %v1221 = vadd.f32 0.0, %v1220
        %v1222 = vpop.f32.mrf.mxu0
        %v1223 = vadd.f32 0.0, %v1222
        %1224 = vmatmul.bf16.gmra.mxu0 %v1187
        %v1225 = vpop.f32.mrf.mxu0
        %v1226 = vadd.f32 0.0, %v1225
        %v1227 = vpop.f32.mrf.mxu0
        %v1228 = vadd.f32 0.0, %v1227
        %1229 = vdwg.mxu0
        %v1238 = vunpack.c.l.b16 %v995
        %v1239 = vunpack.c.l.b16 %v996
        %v1240 = vunpack.c.l.b16 %v997
        %v1241 = vunpack.c.l.b16 %v998
        %v1242 = vunpack.c.l.b16 %v999
        %v1243 = vunpack.c.l.b16 %v1000
        %v1244 = vunpack.c.l.b16 %v1001
        %v1245 = vunpack.c.l.b16 %v1002
        %v1246 = vpack.c.b16 %v1239, %v1238
        %v1247 = vpack.c.b16 %v1241, %v1240
        %v1248 = vpack.c.b16 %v1243, %v1242
        %v1249 = vpack.c.b16 %v1245, %v1244
        %v1258 = vunpack.c.l.b16 %v1027
        %v1259 = vunpack.c.l.b16 %v1028
        %v1260 = vunpack.c.l.b16 %v1029
        %v1261 = vunpack.c.l.b16 %v1030
        %v1262 = vunpack.c.l.b16 %v1031
        %v1263 = vunpack.c.l.b16 %v1032
        %v1264 = vunpack.c.l.b16 %v1033
        %v1265 = vunpack.c.l.b16 %v1034
        %v1266 = vpack.c.b16 %v1259, %v1258
        %v1267 = vpack.c.b16 %v1261, %v1260
        %v1268 = vpack.c.b16 %v1263, %v1262
        %v1269 = vpack.c.b16 %v1265, %v1264
        %v1271 = vsel %vm1083, %v1246, 0
        %v1274 = vsel %vm1083, %v1247, 0
        %v1277 = vsel %vm1083, %v1248, 0
        %v1280 = vsel %vm1083, %v1249, 0
        %v1283 = vsel %vm1083, %v1266, 0
        %v1286 = vsel %vm1083, %v1267, 0
        %v1289 = vsel %vm1083, %v1268, 0
        %v1292 = vsel %vm1083, %v1269, 0
        %1294 = vmatpush.bf16.xpose.msra.mxu0 0
        %1295 = vmatpush.bf16.xpose.msra.mxu0 0
        %1296 = vmatpush.bf16.xpose.msra.mxu0 0
        %1297 = vmatpush.bf16.xpose.msra.mxu0 0
        %1298 = vmatpush.bf16.xpose.msra.mxu0 %v1292
        %1299 = vmatpush.bf16.xpose.msra.mxu0 %v1289
        %1300 = vmatpush.bf16.xpose.msra.mxu0 %v1286
        %1301 = vmatpush.bf16.xpose.msra.mxu0 %v1283
        %1302 = vmatmul.bf16.gmra.mxu0 %v1271
        %v1303 = vpop.f32.mrf.mxu0
        %v1304 = vadd.f32 0.0, %v1303
        %v1305 = vpop.f32.mrf.mxu0
        %v1306 = vadd.f32 0.0, %v1305
        %1307 = vmatmul.bf16.gmra.mxu0 %v1274
        %v1308 = vpop.f32.mrf.mxu0
        %v1309 = vadd.f32 0.0, %v1308
        %v1310 = vpop.f32.mrf.mxu0
        %v1311 = vadd.f32 0.0, %v1310
        %1312 = vmatmul.bf16.gmra.mxu0 %v1277
        %v1313 = vpop.f32.mrf.mxu0
        %v1314 = vadd.f32 0.0, %v1313
        %v1315 = vpop.f32.mrf.mxu0
        %v1316 = vadd.f32 0.0, %v1315
        %1317 = vmatmul.bf16.gmra.mxu0 %v1280
        %v1318 = vpop.f32.mrf.mxu0
        %v1319 = vadd.f32 0.0, %v1318
        %v1320 = vpop.f32.mrf.mxu0
        %v1321 = vadd.f32 0.0, %v1320
        %1322 = vdwg.mxu0
        %v1331 = vunpack.c.l.b16 %v1003
        %v1332 = vunpack.c.l.b16 %v1004
        %v1333 = vunpack.c.l.b16 %v1005
        %v1334 = vunpack.c.l.b16 %v1006
        %v1335 = vunpack.c.l.b16 %v1007
        %v1336 = vunpack.c.l.b16 %v1008
        %v1337 = vunpack.c.l.b16 %v1009
        %v1338 = vunpack.c.l.b16 %v1010
        %v1339 = vpack.c.b16 %v1332, %v1331
        %v1340 = vpack.c.b16 %v1334, %v1333
        %v1341 = vpack.c.b16 %v1336, %v1335
        %v1342 = vpack.c.b16 %v1338, %v1337
        %v1351 = vunpack.c.l.b16 %v1035
        %v1352 = vunpack.c.l.b16 %v1036
        %v1353 = vunpack.c.l.b16 %v1037
        %v1354 = vunpack.c.l.b16 %v1038
        %v1355 = vunpack.c.l.b16 %v1039
        %v1356 = vunpack.c.l.b16 %v1040
        %v1357 = vunpack.c.l.b16 %v1041
        %v1358 = vunpack.c.l.b16 %v1042
        %v1359 = vpack.c.b16 %v1352, %v1351
        %v1360 = vpack.c.b16 %v1354, %v1353
        %v1361 = vpack.c.b16 %v1356, %v1355
        %v1362 = vpack.c.b16 %v1358, %v1357
        %v1364 = vsel %vm1083, %v1339, 0
        %v1367 = vsel %vm1083, %v1340, 0
        %v1370 = vsel %vm1083, %v1341, 0
        %v1373 = vsel %vm1083, %v1342, 0
        %v1376 = vsel %vm1083, %v1359, 0
        %v1379 = vsel %vm1083, %v1360, 0
        %v1382 = vsel %vm1083, %v1361, 0
        %v1385 = vsel %vm1083, %v1362, 0
        %1387 = vmatpush.bf16.xpose.msra.mxu0 0
        %1388 = vmatpush.bf16.xpose.msra.mxu0 0
        %1389 = vmatpush.bf16.xpose.msra.mxu0 0
        %1390 = vmatpush.bf16.xpose.msra.mxu0 0
        %1391 = vmatpush.bf16.xpose.msra.mxu0 %v1385
        %1392 = vmatpush.bf16.xpose.msra.mxu0 %v1382
        %1393 = vmatpush.bf16.xpose.msra.mxu0 %v1379
        %1394 = vmatpush.bf16.xpose.msra.mxu0 %v1376
        %1395 = vmatmul.bf16.gmra.mxu0 %v1364
        %v1396 = vpop.f32.mrf.mxu0
        %v1397 = vadd.f32 0.0, %v1396
        %v1398 = vpop.f32.mrf.mxu0
        %v1399 = vadd.f32 0.0, %v1398
        %1400 = vmatmul.bf16.gmra.mxu0 %v1367
        %v1401 = vpop.f32.mrf.mxu0
        %v1402 = vadd.f32 0.0, %v1401
        %v1403 = vpop.f32.mrf.mxu0
        %v1404 = vadd.f32 0.0, %v1403
        %1405 = vmatmul.bf16.gmra.mxu0 %v1370
        %v1406 = vpop.f32.mrf.mxu0
        %v1407 = vadd.f32 0.0, %v1406
        %v1408 = vpop.f32.mrf.mxu0
        %v1409 = vadd.f32 0.0, %v1408
        %1410 = vmatmul.bf16.gmra.mxu0 %v1373
        %v1411 = vpop.f32.mrf.mxu0
        %v1412 = vadd.f32 0.0, %v1411
        %v1413 = vpop.f32.mrf.mxu0
        %v1414 = vadd.f32 0.0, %v1413
        %1415 = vdwg.mxu0
        %v1416 = vsel %vm559, %v1118, -inf
        %1417 = vmax.xlane.f32.xlu0 %v1416
        %v1418 = vpop.xlane.xlu0 %1417
        %v1419 = vsel %vm559, %v1120, -inf
        %1420 = vmax.xlane.f32.xlu0 %v1419
        %v1421 = vpop.xlane.xlu0 %1420
        %v1422 = vsel %vm559, %v1123, -inf
        %1423 = vmax.xlane.f32.xlu0 %v1422
        %v1424 = vpop.xlane.xlu0 %1423
        %v1425 = vsel %vm559, %v1125, -inf
        %1426 = vmax.xlane.f32.xlu0 %v1425
        %v1427 = vpop.xlane.xlu0 %1426
        %v1428 = vsel %vm559, %v1128, -inf
        %1429 = vmax.xlane.f32.xlu0 %v1428
        %v1430 = vpop.xlane.xlu0 %1429
        %v1431 = vsel %vm559, %v1130, -inf
        %1432 = vmax.xlane.f32.xlu0 %v1431
        %v1433 = vpop.xlane.xlu0 %1432
        %v1434 = vsel %vm559, %v1133, -inf
        %1435 = vmax.xlane.f32.xlu0 %v1434
        %v1436 = vpop.xlane.xlu0 %1435
        %v1437 = vsel %vm559, %v1135, -inf
        %1438 = vmax.xlane.f32.xlu0 %v1437
        %v1439 = vpop.xlane.xlu0 %1438
        %v1440 = vsel %vm559, %v1211, -inf
        %1441 = vmax.xlane.f32.xlu0 %v1440
        %v1442 = vpop.xlane.xlu0 %1441
        %v1443 = vsel %vm559, %v1213, -inf
        %1444 = vmax.xlane.f32.xlu0 %v1443
        %v1445 = vpop.xlane.xlu0 %1444
        %v1446 = vsel %vm559, %v1216, -inf
        %1447 = vmax.xlane.f32.xlu0 %v1446
        %v1448 = vpop.xlane.xlu0 %1447
        %v1449 = vsel %vm559, %v1218, -inf
        %1450 = vmax.xlane.f32.xlu0 %v1449
        %v1451 = vpop.xlane.xlu0 %1450
        %v1452 = vsel %vm559, %v1221, -inf
        %1453 = vmax.xlane.f32.xlu0 %v1452
        %v1454 = vpop.xlane.xlu0 %1453
        %v1455 = vsel %vm559, %v1223, -inf
        %1456 = vmax.xlane.f32.xlu0 %v1455
        %v1457 = vpop.xlane.xlu0 %1456
        %v1458 = vsel %vm559, %v1226, -inf
        %1459 = vmax.xlane.f32.xlu0 %v1458
        %v1460 = vpop.xlane.xlu0 %1459
        %v1461 = vsel %vm559, %v1228, -inf
        %1462 = vmax.xlane.f32.xlu0 %v1461
        %v1463 = vpop.xlane.xlu0 %1462
        %v1464 = vsel %vm559, %v1304, -inf
        %1465 = vmax.xlane.f32.xlu0 %v1464
        %v1466 = vpop.xlane.xlu0 %1465
        %v1467 = vsel %vm559, %v1306, -inf
        %1468 = vmax.xlane.f32.xlu0 %v1467
        %v1469 = vpop.xlane.xlu0 %1468
        %v1470 = vsel %vm559, %v1309, -inf
        %1471 = vmax.xlane.f32.xlu0 %v1470
        %v1472 = vpop.xlane.xlu0 %1471
        %v1473 = vsel %vm559, %v1311, -inf
        %1474 = vmax.xlane.f32.xlu0 %v1473
        %v1475 = vpop.xlane.xlu0 %1474
        %v1476 = vsel %vm559, %v1314, -inf
        %1477 = vmax.xlane.f32.xlu0 %v1476
        %v1478 = vpop.xlane.xlu0 %1477
        %v1479 = vsel %vm559, %v1316, -inf
        %1480 = vmax.xlane.f32.xlu0 %v1479
        %v1481 = vpop.xlane.xlu0 %1480
        %v1482 = vsel %vm559, %v1319, -inf
        %1483 = vmax.xlane.f32.xlu0 %v1482
        %v1484 = vpop.xlane.xlu0 %1483
        %v1485 = vsel %vm559, %v1321, -inf
        %1486 = vmax.xlane.f32.xlu0 %v1485
        %v1487 = vpop.xlane.xlu0 %1486
        %v1488 = vsel %vm559, %v1397, -inf
        %1489 = vmax.xlane.f32.xlu0 %v1488
        %v1490 = vpop.xlane.xlu0 %1489
        %v1491 = vsel %vm559, %v1399, -inf
        %1492 = vmax.xlane.f32.xlu0 %v1491
        %v1493 = vpop.xlane.xlu0 %1492
        %v1494 = vsel %vm559, %v1402, -inf
        %1495 = vmax.xlane.f32.xlu0 %v1494
        %v1496 = vpop.xlane.xlu0 %1495
        %v1497 = vsel %vm559, %v1404, -inf
        %1498 = vmax.xlane.f32.xlu0 %v1497
        %v1499 = vpop.xlane.xlu0 %1498
        %v1500 = vsel %vm559, %v1407, -inf
        %1501 = vmax.xlane.f32.xlu0 %v1500
        %v1502 = vpop.xlane.xlu0 %1501
        %v1503 = vsel %vm559, %v1409, -inf
        %1504 = vmax.xlane.f32.xlu0 %v1503
        %v1505 = vpop.xlane.xlu0 %1504
        %v1506 = vsel %vm559, %v1412, -inf
        %1507 = vmax.xlane.f32.xlu0 %v1506
        %v1508 = vpop.xlane.xlu0 %1507
        %v1509 = vsel %vm559, %v1414, -inf
        %1510 = vmax.xlane.f32.xlu0 %v1509
        %v1511 = vpop.xlane.xlu0 %1510
        %v1512 = vsub.f32 %v1118, %v1418
        %v1513 = vsub.f32 %v1120, %v1421
        %v1514 = vsub.f32 %v1123, %v1424
        %v1515 = vsub.f32 %v1125, %v1427
        %v1516 = vsub.f32 %v1128, %v1430
        %v1517 = vsub.f32 %v1130, %v1433
        %v1518 = vsub.f32 %v1133, %v1436
        %v1519 = vsub.f32 %v1135, %v1439
        %v1520 = vsub.f32 %v1211, %v1442
        %v1521 = vsub.f32 %v1213, %v1445
        %v1522 = vsub.f32 %v1216, %v1448
        %v1523 = vsub.f32 %v1218, %v1451
        %v1524 = vsub.f32 %v1221, %v1454
        %v1525 = vsub.f32 %v1223, %v1457
        %v1526 = vsub.f32 %v1226, %v1460
        %v1527 = vsub.f32 %v1228, %v1463
        %v1528 = vsub.f32 %v1304, %v1466
        %v1529 = vsub.f32 %v1306, %v1469
        %v1530 = vsub.f32 %v1309, %v1472
        %v1531 = vsub.f32 %v1311, %v1475
        %v1532 = vsub.f32 %v1314, %v1478
        %v1533 = vsub.f32 %v1316, %v1481
        %v1534 = vsub.f32 %v1319, %v1484
        %v1535 = vsub.f32 %v1321, %v1487
        %v1536 = vsub.f32 %v1397, %v1490
        %v1537 = vsub.f32 %v1399, %v1493
        %v1538 = vsub.f32 %v1402, %v1496
        %v1539 = vsub.f32 %v1404, %v1499
        %v1540 = vsub.f32 %v1407, %v1502
        %v1541 = vsub.f32 %v1409, %v1505
        %v1542 = vsub.f32 %v1412, %v1508
        %v1543 = vsub.f32 %v1414, %v1511
        %v1544 = vmul.f32 %v1512, 1.442695
        %v1545 = vpow.pop %v1544
        %v1546 = vmul.f32 %v1513, 1.442695
        %v1547 = vpow.pop %v1546
        %v1548 = vmul.f32 %v1514, 1.442695
        %v1549 = vpow.pop %v1548
        %v1550 = vmul.f32 %v1515, 1.442695
        %v1551 = vpow.pop %v1550
        %v1552 = vmul.f32 %v1516, 1.442695
        %v1553 = vpow.pop %v1552
        %v1554 = vmul.f32 %v1517, 1.442695
        %v1555 = vpow.pop %v1554
        %v1556 = vmul.f32 %v1518, 1.442695
        %v1557 = vpow.pop %v1556
        %v1558 = vmul.f32 %v1519, 1.442695
        %v1559 = vpow.pop %v1558
        %v1560 = vmul.f32 %v1520, 1.442695
        %v1561 = vpow.pop %v1560
        %v1562 = vmul.f32 %v1521, 1.442695
        %v1563 = vpow.pop %v1562
        %v1564 = vmul.f32 %v1522, 1.442695
        %v1565 = vpow.pop %v1564
        %v1566 = vmul.f32 %v1523, 1.442695
        %v1567 = vpow.pop %v1566
        %v1568 = vmul.f32 %v1524, 1.442695
        %v1569 = vpow.pop %v1568
        %v1570 = vmul.f32 %v1525, 1.442695
        %v1571 = vpow.pop %v1570
        %v1572 = vmul.f32 %v1526, 1.442695
        %v1573 = vpow.pop %v1572
        %v1574 = vmul.f32 %v1527, 1.442695
        %v1575 = vpow.pop %v1574
        %v1576 = vmul.f32 %v1528, 1.442695
        %v1577 = vpow.pop %v1576
        %v1578 = vmul.f32 %v1529, 1.442695
        %v1579 = vpow.pop %v1578
        %v1580 = vmul.f32 %v1530, 1.442695
        %v1581 = vpow.pop %v1580
        %v1582 = vmul.f32 %v1531, 1.442695
        %v1583 = vpow.pop %v1582
        %v1584 = vmul.f32 %v1532, 1.442695
        %v1585 = vpow.pop %v1584
        %v1586 = vmul.f32 %v1533, 1.442695
        %v1587 = vpow.pop %v1586
        %v1588 = vmul.f32 %v1534, 1.442695
        %v1589 = vpow.pop %v1588
        %v1590 = vmul.f32 %v1535, 1.442695
        %v1591 = vpow.pop %v1590
        %v1592 = vmul.f32 %v1536, 1.442695
        %v1593 = vpow.pop %v1592
        %v1594 = vmul.f32 %v1537, 1.442695
        %v1595 = vpow.pop %v1594
        %v1596 = vmul.f32 %v1538, 1.442695
        %v1597 = vpow.pop %v1596
        %v1598 = vmul.f32 %v1539, 1.442695
        %v1599 = vpow.pop %v1598
        %v1600 = vmul.f32 %v1540, 1.442695
        %v1601 = vpow.pop %v1600
        %v1602 = vmul.f32 %v1541, 1.442695
        %v1603 = vpow.pop %v1602
        %v1604 = vmul.f32 %v1542, 1.442695
        %v1605 = vpow.pop %v1604
        %v1606 = vmul.f32 %v1543, 1.442695
        %v1607 = vpow.pop %v1606
        %v1608 = vsel %vm559, %v1545, 0.0
        %1609 = vadd.xlane.f32.xlu0 %v1608
        %v1610 = vpop.xlane.xlu0 %1609
        %v1611 = vsel %vm559, %v1547, 0.0
        %1612 = vadd.xlane.f32.xlu0 %v1611
        %v1613 = vpop.xlane.xlu0 %1612
        %v1614 = vsel %vm559, %v1549, 0.0
        %1615 = vadd.xlane.f32.xlu0 %v1614
        %v1616 = vpop.xlane.xlu0 %1615
        %v1617 = vsel %vm559, %v1551, 0.0
        %1618 = vadd.xlane.f32.xlu0 %v1617
        %v1619 = vpop.xlane.xlu0 %1618
        %v1620 = vsel %vm559, %v1553, 0.0
        %1621 = vadd.xlane.f32.xlu0 %v1620
        %v1622 = vpop.xlane.xlu0 %1621
        %v1623 = vsel %vm559, %v1555, 0.0
        %1624 = vadd.xlane.f32.xlu0 %v1623
        %v1625 = vpop.xlane.xlu0 %1624
        %v1626 = vsel %vm559, %v1557, 0.0
        %1627 = vadd.xlane.f32.xlu0 %v1626
        %v1628 = vpop.xlane.xlu0 %1627
        %v1629 = vsel %vm559, %v1559, 0.0
        %1630 = vadd.xlane.f32.xlu0 %v1629
        %v1631 = vpop.xlane.xlu0 %1630
        %v1632 = vsel %vm559, %v1561, 0.0
        %1633 = vadd.xlane.f32.xlu0 %v1632
        %v1634 = vpop.xlane.xlu0 %1633
        %v1635 = vsel %vm559, %v1563, 0.0
        %1636 = vadd.xlane.f32.xlu0 %v1635
        %v1637 = vpop.xlane.xlu0 %1636
        %v1638 = vsel %vm559, %v1565, 0.0
        %1639 = vadd.xlane.f32.xlu0 %v1638
        %v1640 = vpop.xlane.xlu0 %1639
        %v1641 = vsel %vm559, %v1567, 0.0
        %1642 = vadd.xlane.f32.xlu0 %v1641
        %v1643 = vpop.xlane.xlu0 %1642
        %v1644 = vsel %vm559, %v1569, 0.0
        %1645 = vadd.xlane.f32.xlu0 %v1644
        %v1646 = vpop.xlane.xlu0 %1645
        %v1647 = vsel %vm559, %v1571, 0.0
        %1648 = vadd.xlane.f32.xlu0 %v1647
        %v1649 = vpop.xlane.xlu0 %1648
        %v1650 = vsel %vm559, %v1573, 0.0
        %1651 = vadd.xlane.f32.xlu0 %v1650
        %v1652 = vpop.xlane.xlu0 %1651
        %v1653 = vsel %vm559, %v1575, 0.0
        %1654 = vadd.xlane.f32.xlu0 %v1653
        %v1655 = vpop.xlane.xlu0 %1654
        %v1656 = vsel %vm559, %v1577, 0.0
        %1657 = vadd.xlane.f32.xlu0 %v1656
        %v1658 = vpop.xlane.xlu0 %1657
        %v1659 = vsel %vm559, %v1579, 0.0
        %1660 = vadd.xlane.f32.xlu0 %v1659
        %v1661 = vpop.xlane.xlu0 %1660
        %v1662 = vsel %vm559, %v1581, 0.0
        %1663 = vadd.xlane.f32.xlu0 %v1662
        %v1664 = vpop.xlane.xlu0 %1663
        %v1665 = vsel %vm559, %v1583, 0.0
        %1666 = vadd.xlane.f32.xlu0 %v1665
        %v1667 = vpop.xlane.xlu0 %1666
        %v1668 = vsel %vm559, %v1585, 0.0
        %1669 = vadd.xlane.f32.xlu0 %v1668
        %v1670 = vpop.xlane.xlu0 %1669
        %v1671 = vsel %vm559, %v1587, 0.0
        %1672 = vadd.xlane.f32.xlu0 %v1671
        %v1673 = vpop.xlane.xlu0 %1672
        %v1674 = vsel %vm559, %v1589, 0.0
        %1675 = vadd.xlane.f32.xlu0 %v1674
        %v1676 = vpop.xlane.xlu0 %1675
        %v1677 = vsel %vm559, %v1591, 0.0
        %1678 = vadd.xlane.f32.xlu0 %v1677
        %v1679 = vpop.xlane.xlu0 %1678
        %v1680 = vsel %vm559, %v1593, 0.0
        %1681 = vadd.xlane.f32.xlu0 %v1680
        %v1682 = vpop.xlane.xlu0 %1681
        %v1683 = vsel %vm559, %v1595, 0.0
        %1684 = vadd.xlane.f32.xlu0 %v1683
        %v1685 = vpop.xlane.xlu0 %1684
        %v1686 = vsel %vm559, %v1597, 0.0
        %1687 = vadd.xlane.f32.xlu0 %v1686
        %v1688 = vpop.xlane.xlu0 %1687
        %v1689 = vsel %vm559, %v1599, 0.0
        %1690 = vadd.xlane.f32.xlu0 %v1689
        %v1691 = vpop.xlane.xlu0 %1690
        %v1692 = vsel %vm559, %v1601, 0.0
        %1693 = vadd.xlane.f32.xlu0 %v1692
        %v1694 = vpop.xlane.xlu0 %1693
        %v1695 = vsel %vm559, %v1603, 0.0
        %1696 = vadd.xlane.f32.xlu0 %v1695
        %v1697 = vpop.xlane.xlu0 %1696
        %v1698 = vsel %vm559, %v1605, 0.0
        %1699 = vadd.xlane.f32.xlu0 %v1698
        %v1700 = vpop.xlane.xlu0 %1699
        %v1701 = vsel %vm559, %v1607, 0.0
        %1702 = vadd.xlane.f32.xlu0 %v1701
        %v1703 = vpop.xlane.xlu0 %1702
        %v1704 = vrcp.pop %v1610
        %v1705 = vrcp.pop %v1613
        %v1706 = vrcp.pop %v1616
        %v1707 = vrcp.pop %v1619
        %v1708 = vrcp.pop %v1622
        %v1709 = vrcp.pop %v1625
        %v1710 = vrcp.pop %v1628
        %v1711 = vrcp.pop %v1631
        %v1712 = vrcp.pop %v1634
        %v1713 = vrcp.pop %v1637
        %v1714 = vrcp.pop %v1640
        %v1715 = vrcp.pop %v1643
        %v1716 = vrcp.pop %v1646
        %v1717 = vrcp.pop %v1649
        %v1718 = vrcp.pop %v1652
        %v1719 = vrcp.pop %v1655
        %v1720 = vrcp.pop %v1658
        %v1721 = vrcp.pop %v1661
        %v1722 = vrcp.pop %v1664
        %v1723 = vrcp.pop %v1667
        %v1724 = vrcp.pop %v1670
        %v1725 = vrcp.pop %v1673
        %v1726 = vrcp.pop %v1676
        %v1727 = vrcp.pop %v1679
        %v1728 = vrcp.pop %v1682
        %v1729 = vrcp.pop %v1685
        %v1730 = vrcp.pop %v1688
        %v1731 = vrcp.pop %v1691
        %v1732 = vrcp.pop %v1694
        %v1733 = vrcp.pop %v1697
        %v1734 = vrcp.pop %v1700
        %v1735 = vrcp.pop %v1703
        %v1736 = vmul.f32 %v1545, %v1704
        %v1737 = vmul.f32 %v1547, %v1705
        %v1738 = vmul.f32 %v1549, %v1706
        %v1739 = vmul.f32 %v1551, %v1707
        %v1740 = vmul.f32 %v1553, %v1708
        %v1741 = vmul.f32 %v1555, %v1709
        %v1742 = vmul.f32 %v1557, %v1710
        %v1743 = vmul.f32 %v1559, %v1711
        %v1744 = vmul.f32 %v1561, %v1712
        %v1745 = vmul.f32 %v1563, %v1713
        %v1746 = vmul.f32 %v1565, %v1714
        %v1747 = vmul.f32 %v1567, %v1715
        %v1748 = vmul.f32 %v1569, %v1716
        %v1749 = vmul.f32 %v1571, %v1717
        %v1750 = vmul.f32 %v1573, %v1718
        %v1751 = vmul.f32 %v1575, %v1719
        %v1752 = vmul.f32 %v1577, %v1720
        %v1753 = vmul.f32 %v1579, %v1721
        %v1754 = vmul.f32 %v1581, %v1722
        %v1755 = vmul.f32 %v1583, %v1723
        %v1756 = vmul.f32 %v1585, %v1724
        %v1757 = vmul.f32 %v1587, %v1725
        %v1758 = vmul.f32 %v1589, %v1726
        %v1759 = vmul.f32 %v1591, %v1727
        %v1760 = vmul.f32 %v1593, %v1728
        %v1761 = vmul.f32 %v1595, %v1729
        %v1762 = vmul.f32 %v1597, %v1730
        %v1763 = vmul.f32 %v1599, %v1731
        %v1764 = vmul.f32 %v1601, %v1732
        %v1765 = vmul.f32 %v1603, %v1733
        %v1766 = vmul.f32 %v1605, %v1734
        %v1767 = vmul.f32 %v1607, %v1735
        %v1768 = vpack.c.bf16 %v1736, %v1736
        %v1769 = vpack.c.bf16 %v1737, %v1737
        %v1770 = vpack.c.bf16 %v1738, %v1738
        %v1771 = vpack.c.bf16 %v1739, %v1739
        %v1772 = vpack.c.bf16 %v1740, %v1740
        %v1773 = vpack.c.bf16 %v1741, %v1741
        %v1774 = vpack.c.bf16 %v1742, %v1742
        %v1775 = vpack.c.bf16 %v1743, %v1743
        %v1776 = vpack.c.bf16 %v1744, %v1744
        %v1777 = vpack.c.bf16 %v1745, %v1745
        %v1778 = vpack.c.bf16 %v1746, %v1746
        %v1779 = vpack.c.bf16 %v1747, %v1747
        %v1780 = vpack.c.bf16 %v1748, %v1748
        %v1781 = vpack.c.bf16 %v1749, %v1749
        %v1782 = vpack.c.bf16 %v1750, %v1750
        %v1783 = vpack.c.bf16 %v1751, %v1751
        %v1784 = vpack.c.bf16 %v1752, %v1752
        %v1785 = vpack.c.bf16 %v1753, %v1753
        %v1786 = vpack.c.bf16 %v1754, %v1754
        %v1787 = vpack.c.bf16 %v1755, %v1755
        %v1788 = vpack.c.bf16 %v1756, %v1756
        %v1789 = vpack.c.bf16 %v1757, %v1757
        %v1790 = vpack.c.bf16 %v1758, %v1758
        %v1791 = vpack.c.bf16 %v1759, %v1759
        %v1792 = vpack.c.bf16 %v1760, %v1760
        %v1793 = vpack.c.bf16 %v1761, %v1761
        %v1794 = vpack.c.bf16 %v1762, %v1762
        %v1795 = vpack.c.bf16 %v1763, %v1763
        %v1796 = vpack.c.bf16 %v1764, %v1764
        %v1797 = vpack.c.bf16 %v1765, %v1765
        %v1798 = vpack.c.bf16 %v1766, %v1766
        %v1799 = vpack.c.bf16 %v1767, %v1767
        %v1808 = vunpack.c.l.b16 %v1768
        %v1809 = vunpack.c.l.b16 %v1769
        %v1810 = vunpack.c.l.b16 %v1770
        %v1811 = vunpack.c.l.b16 %v1771
        %v1812 = vunpack.c.l.b16 %v1772
        %v1813 = vunpack.c.l.b16 %v1773
        %v1814 = vunpack.c.l.b16 %v1774
        %v1815 = vunpack.c.l.b16 %v1775
        %v1816 = vpack.c.b16 %v1809, %v1808
        %v1817 = vpack.c.b16 %v1811, %v1810
        %v1818 = vpack.c.b16 %v1813, %v1812
        %v1819 = vpack.c.b16 %v1815, %v1814
        %v1828 = vunpack.c.l.b16 %v947
        %v1829 = vunpack.c.l.b16 %v948
        %v1830 = vunpack.c.l.b16 %v949
        %v1831 = vunpack.c.l.b16 %v950
        %v1832 = vunpack.c.l.b16 %v951
        %v1833 = vunpack.c.l.b16 %v952
        %v1834 = vunpack.c.l.b16 %v953
        %v1835 = vunpack.c.l.b16 %v954
        %v1836 = vpack.c.b16 %v1829, %v1828
        %v1837 = vpack.c.b16 %v1831, %v1830
        %v1838 = vpack.c.b16 %v1833, %v1832
        %v1839 = vpack.c.b16 %v1835, %v1834
        %v1845 = vsel %vm559, %v1816, 0
        %v1848 = vsel %vm559, %v1817, 0
        %v1851 = vsel %vm559, %v1818, 0
        %v1854 = vsel %vm559, %v1819, 0
        %1856 = vmatpush.bf16.msra.mxu0 0
        %1857 = vmatpush.bf16.msra.mxu0 0
        %1858 = vmatpush.bf16.msra.mxu0 0
        %1859 = vmatpush.bf16.msra.mxu0 0
        %1860 = vmatpush.bf16.msra.mxu0 %v1839
        %1861 = vmatpush.bf16.msra.mxu0 %v1838
        %1862 = vmatpush.bf16.msra.mxu0 %v1837
        %1863 = vmatpush.bf16.msra.mxu0 %v1836
        %1864 = vmatmul.bf16.gmra.mxu0 %v1845
        %v1865 = vpop.f32.mrf.mxu0
        %v1866 = vadd.f32 0.0, %v1865
        %v1867 = vpop.f32.mrf.mxu0
        %v1868 = vadd.f32 0.0, %v1867
        %1869 = vmatmul.bf16.gmra.mxu0 %v1848
        %v1870 = vpop.f32.mrf.mxu0
        %v1871 = vadd.f32 0.0, %v1870
        %v1872 = vpop.f32.mrf.mxu0
        %v1873 = vadd.f32 0.0, %v1872
        %1874 = vmatmul.bf16.gmra.mxu0 %v1851
        %v1875 = vpop.f32.mrf.mxu0
        %v1876 = vadd.f32 0.0, %v1875
        %v1877 = vpop.f32.mrf.mxu0
        %v1878 = vadd.f32 0.0, %v1877
        %1879 = vmatmul.bf16.gmra.mxu0 %v1854
        %v1880 = vpop.f32.mrf.mxu0
        %v1881 = vadd.f32 0.0, %v1880
        %v1882 = vpop.f32.mrf.mxu0
        %v1883 = vadd.f32 0.0, %v1882
        %1884 = vdwg.mxu0
        %v1893 = vunpack.c.l.b16 %v1776
        %v1894 = vunpack.c.l.b16 %v1777
        %v1895 = vunpack.c.l.b16 %v1778
        %v1896 = vunpack.c.l.b16 %v1779
        %v1897 = vunpack.c.l.b16 %v1780
        %v1898 = vunpack.c.l.b16 %v1781
        %v1899 = vunpack.c.l.b16 %v1782
        %v1900 = vunpack.c.l.b16 %v1783
        %v1901 = vpack.c.b16 %v1894, %v1893
        %v1902 = vpack.c.b16 %v1896, %v1895
        %v1903 = vpack.c.b16 %v1898, %v1897
        %v1904 = vpack.c.b16 %v1900, %v1899
        %v1913 = vunpack.c.l.b16 %v955
        %v1914 = vunpack.c.l.b16 %v956
        %v1915 = vunpack.c.l.b16 %v957
        %v1916 = vunpack.c.l.b16 %v958
        %v1917 = vunpack.c.l.b16 %v959
        %v1918 = vunpack.c.l.b16 %v960
        %v1919 = vunpack.c.l.b16 %v961
        %v1920 = vunpack.c.l.b16 %v962
        %v1921 = vpack.c.b16 %v1914, %v1913
        %v1922 = vpack.c.b16 %v1916, %v1915
        %v1923 = vpack.c.b16 %v1918, %v1917
        %v1924 = vpack.c.b16 %v1920, %v1919
        %v1930 = vsel %vm559, %v1901, 0
        %v1933 = vsel %vm559, %v1902, 0
        %v1936 = vsel %vm559, %v1903, 0
        %v1939 = vsel %vm559, %v1904, 0
        %1941 = vmatpush.bf16.msra.mxu0 0
        %1942 = vmatpush.bf16.msra.mxu0 0
        %1943 = vmatpush.bf16.msra.mxu0 0
        %1944 = vmatpush.bf16.msra.mxu0 0
        %1945 = vmatpush.bf16.msra.mxu0 %v1924
        %1946 = vmatpush.bf16.msra.mxu0 %v1923
        %1947 = vmatpush.bf16.msra.mxu0 %v1922
        %1948 = vmatpush.bf16.msra.mxu0 %v1921
        %1949 = vmatmul.bf16.gmra.mxu0 %v1930
        %v1950 = vpop.f32.mrf.mxu0
        %v1951 = vadd.f32 0.0, %v1950
        %v1952 = vpop.f32.mrf.mxu0
        %v1953 = vadd.f32 0.0, %v1952
        %1954 = vmatmul.bf16.gmra.mxu0 %v1933
        %v1955 = vpop.f32.mrf.mxu0
        %v1956 = vadd.f32 0.0, %v1955
        %v1957 = vpop.f32.mrf.mxu0
        %v1958 = vadd.f32 0.0, %v1957
        %1959 = vmatmul.bf16.gmra.mxu0 %v1936
        %v1960 = vpop.f32.mrf.mxu0
        %v1961 = vadd.f32 0.0, %v1960
        %v1962 = vpop.f32.mrf.mxu0
        %v1963 = vadd.f32 0.0, %v1962
        %1964 = vmatmul.bf16.gmra.mxu0 %v1939
        %v1965 = vpop.f32.mrf.mxu0
        %v1966 = vadd.f32 0.0, %v1965
        %v1967 = vpop.f32.mrf.mxu0
        %v1968 = vadd.f32 0.0, %v1967
        %1969 = vdwg.mxu0
        %v1978 = vunpack.c.l.b16 %v1784
        %v1979 = vunpack.c.l.b16 %v1785
        %v1980 = vunpack.c.l.b16 %v1786
        %v1981 = vunpack.c.l.b16 %v1787
        %v1982 = vunpack.c.l.b16 %v1788
        %v1983 = vunpack.c.l.b16 %v1789
        %v1984 = vunpack.c.l.b16 %v1790
        %v1985 = vunpack.c.l.b16 %v1791
        %v1986 = vpack.c.b16 %v1979, %v1978
        %v1987 = vpack.c.b16 %v1981, %v1980
        %v1988 = vpack.c.b16 %v1983, %v1982
        %v1989 = vpack.c.b16 %v1985, %v1984
        %v1998 = vunpack.c.l.b16 %v963
        %v1999 = vunpack.c.l.b16 %v964
        %v2000 = vunpack.c.l.b16 %v965
        %v2001 = vunpack.c.l.b16 %v966
        %v2002 = vunpack.c.l.b16 %v967
        %v2003 = vunpack.c.l.b16 %v968
        %v2004 = vunpack.c.l.b16 %v969
        %v2005 = vunpack.c.l.b16 %v970
        %v2006 = vpack.c.b16 %v1999, %v1998
        %v2007 = vpack.c.b16 %v2001, %v2000
        %v2008 = vpack.c.b16 %v2003, %v2002
        %v2009 = vpack.c.b16 %v2005, %v2004
        %v2015 = vsel %vm559, %v1986, 0
        %v2018 = vsel %vm559, %v1987, 0
        %v2021 = vsel %vm559, %v1988, 0
        %v2024 = vsel %vm559, %v1989, 0
        %2026 = vmatpush.bf16.msra.mxu0 0
        %2027 = vmatpush.bf16.msra.mxu0 0
        %2028 = vmatpush.bf16.msra.mxu0 0
        %2029 = vmatpush.bf16.msra.mxu0 0
        %2030 = vmatpush.bf16.msra.mxu0 %v2009
        %2031 = vmatpush.bf16.msra.mxu0 %v2008
        %2032 = vmatpush.bf16.msra.mxu0 %v2007
        %2033 = vmatpush.bf16.msra.mxu0 %v2006
        %2034 = vmatmul.bf16.gmra.mxu0 %v2015
        %v2035 = vpop.f32.mrf.mxu0
        %v2036 = vadd.f32 0.0, %v2035
        %v2037 = vpop.f32.mrf.mxu0
        %v2038 = vadd.f32 0.0, %v2037
        %2039 = vmatmul.bf16.gmra.mxu0 %v2018
        %v2040 = vpop.f32.mrf.mxu0
        %v2041 = vadd.f32 0.0, %v2040
        %v2042 = vpop.f32.mrf.mxu0
        %v2043 = vadd.f32 0.0, %v2042
        %2044 = vmatmul.bf16.gmra.mxu0 %v2021
        %v2045 = vpop.f32.mrf.mxu0
        %v2046 = vadd.f32 0.0, %v2045
        %v2047 = vpop.f32.mrf.mxu0
        %v2048 = vadd.f32 0.0, %v2047
        %2049 = vmatmul.bf16.gmra.mxu0 %v2024
        %v2050 = vpop.f32.mrf.mxu0
        %v2051 = vadd.f32 0.0, %v2050
        %v2052 = vpop.f32.mrf.mxu0
        %v2053 = vadd.f32 0.0, %v2052
        %2054 = vdwg.mxu0
        %v2063 = vunpack.c.l.b16 %v1792
        %v2064 = vunpack.c.l.b16 %v1793
        %v2065 = vunpack.c.l.b16 %v1794
        %v2066 = vunpack.c.l.b16 %v1795
        %v2067 = vunpack.c.l.b16 %v1796
        %v2068 = vunpack.c.l.b16 %v1797
        %v2069 = vunpack.c.l.b16 %v1798
        %v2070 = vunpack.c.l.b16 %v1799
        %v2071 = vpack.c.b16 %v2064, %v2063
        %v2072 = vpack.c.b16 %v2066, %v2065
        %v2073 = vpack.c.b16 %v2068, %v2067
        %v2074 = vpack.c.b16 %v2070, %v2069
        %v2083 = vunpack.c.l.b16 %v971
        %v2084 = vunpack.c.l.b16 %v972
        %v2085 = vunpack.c.l.b16 %v973
        %v2086 = vunpack.c.l.b16 %v974
        %v2087 = vunpack.c.l.b16 %v975
        %v2088 = vunpack.c.l.b16 %v976
        %v2089 = vunpack.c.l.b16 %v977
        %v2090 = vunpack.c.l.b16 %v978
        %v2091 = vpack.c.b16 %v2084, %v2083
        %v2092 = vpack.c.b16 %v2086, %v2085
        %v2093 = vpack.c.b16 %v2088, %v2087
        %v2094 = vpack.c.b16 %v2090, %v2089
        %v2100 = vsel %vm559, %v2071, 0
        %v2103 = vsel %vm559, %v2072, 0
        %v2106 = vsel %vm559, %v2073, 0
        %v2109 = vsel %vm559, %v2074, 0
        %2111 = vmatpush.bf16.msra.mxu0 0
        %2112 = vmatpush.bf16.msra.mxu0 0
        %2113 = vmatpush.bf16.msra.mxu0 0
        %2114 = vmatpush.bf16.msra.mxu0 0
        %2115 = vmatpush.bf16.msra.mxu0 %v2094
        %2116 = vmatpush.bf16.msra.mxu0 %v2093
        %2117 = vmatpush.bf16.msra.mxu0 %v2092
        %2118 = vmatpush.bf16.msra.mxu0 %v2091
        %2119 = vmatmul.bf16.gmra.mxu0 %v2100
        %v2120 = vpop.f32.mrf.mxu0
        %v2121 = vadd.f32 0.0, %v2120
        %v2122 = vpop.f32.mrf.mxu0
        %v2123 = vadd.f32 0.0, %v2122
        %2124 = vmatmul.bf16.gmra.mxu0 %v2103
        %v2125 = vpop.f32.mrf.mxu0
        %v2126 = vadd.f32 0.0, %v2125
        %v2127 = vpop.f32.mrf.mxu0
        %v2128 = vadd.f32 0.0, %v2127
        %2129 = vmatmul.bf16.gmra.mxu0 %v2106
        %v2130 = vpop.f32.mrf.mxu0
        %v2131 = vadd.f32 0.0, %v2130
        %v2132 = vpop.f32.mrf.mxu0
        %v2133 = vadd.f32 0.0, %v2132
        %2134 = vmatmul.bf16.gmra.mxu0 %v2109
        %v2135 = vpop.f32.mrf.mxu0
        %v2136 = vadd.f32 0.0, %v2135
        %v2137 = vpop.f32.mrf.mxu0
        %v2138 = vadd.f32 0.0, %v2137
        %2139 = vdwg.mxu0
        %v2140 = vpack.c.bf16 %v1868, %v1866
        %v2141 = vpack.c.bf16 %v1873, %v1871
        %v2142 = vpack.c.bf16 %v1878, %v1876
        %v2143 = vpack.c.bf16 %v1883, %v1881
        %v2144 = vpack.c.bf16 %v1953, %v1951
        %v2145 = vpack.c.bf16 %v1958, %v1956
        %v2146 = vpack.c.bf16 %v1963, %v1961
        %v2147 = vpack.c.bf16 %v1968, %v1966
        %v2148 = vpack.c.bf16 %v2038, %v2036
        %v2149 = vpack.c.bf16 %v2043, %v2041
        %v2150 = vpack.c.bf16 %v2048, %v2046
        %v2151 = vpack.c.bf16 %v2053, %v2051
        %v2152 = vpack.c.bf16 %v2123, %v2121
        %v2153 = vpack.c.bf16 %v2128, %v2126
        %v2154 = vpack.c.bf16 %v2133, %v2131
        %v2155 = vpack.c.bf16 %v2138, %v2136
        %v2156 = vld [vmem:[%s7] sm:$0xf]
        %v2157 = vld [vmem:[%s7 + $0x4] sm:$0xf]
        %v2158 = vld [vmem:[%s7 + $0x8] sm:$0xf]
        %v2159 = vld [vmem:[%s7 + $0xc] sm:$0xf]
        %v2160 = vld [vmem:[%s8] sm:$0x1]
        %v2162 = vperm.slane %v2160, 0
        %v2168 = vunpack.c.l.b16 %v2156
        %v2169 = vunpack.c.l.b16 %v2157
        %v2170 = vunpack.c.l.b16 %v2158
        %v2171 = vunpack.c.l.b16 %v2159
        %v2172 = vpack.c.b16 %v2169, %v2168
        %v2173 = vpack.c.b16 %v2171, %v2170
        %v2177 = vsel %vm1083, %v2140, 0
        %v2180 = vsel %vm1083, %v2141, 0
        %v2183 = vsel %vm1083, %v2142, 0
        %v2186 = vsel %vm1083, %v2143, 0
        %v2189 = vsel %vm1083, %v2144, 0
        %v2192 = vsel %vm1083, %v2145, 0
        %v2195 = vsel %vm1083, %v2146, 0
        %v2198 = vsel %vm1083, %v2147, 0
        %v2201 = vsel %vm1083, %v2148, 0
        %v2204 = vsel %vm1083, %v2149, 0
        %v2207 = vsel %vm1083, %v2150, 0
        %v2210 = vsel %vm1083, %v2151, 0
        %v2213 = vsel %vm1083, %v2152, 0
        %v2216 = vsel %vm1083, %v2153, 0
        %v2219 = vsel %vm1083, %v2154, 0
        %v2222 = vsel %vm1083, %v2155, 0
        %2224 = vmatpush.bf16.msra.mxu0 0
        %2225 = vmatpush.bf16.msra.mxu0 0
        %2226 = vmatpush.bf16.msra.mxu0 0
        %2227 = vmatpush.bf16.msra.mxu0 0
        %2228 = vmatpush.bf16.msra.mxu0 0
        %2229 = vmatpush.bf16.msra.mxu0 0
        %2230 = vmatpush.bf16.msra.mxu0 %v2173
        %2231 = vmatpush.bf16.msra.mxu0 %v2172
        %2232 = vmatmul.bf16.gmra.mxu0 %v2177
        %v2233 = vpop.f32.mrf.mxu0
        %v2234 = vadd.f32 %v2162, %v2233
        %v2235 = vpop.f32.mrf.mxu0
        %v2236 = vadd.f32 %v2162, %v2235
        %2237 = vmatmul.bf16.gmra.mxu0 %v2180
        %v2238 = vpop.f32.mrf.mxu0
        %v2239 = vadd.f32 %v2162, %v2238
        %v2240 = vpop.f32.mrf.mxu0
        %v2241 = vadd.f32 %v2162, %v2240
        %2242 = vmatmul.bf16.gmra.mxu0 %v2183
        %v2243 = vpop.f32.mrf.mxu0
        %v2244 = vadd.f32 %v2162, %v2243
        %v2245 = vpop.f32.mrf.mxu0
        %v2246 = vadd.f32 %v2162, %v2245
        %2247 = vmatmul.bf16.gmra.mxu0 %v2186
        %v2248 = vpop.f32.mrf.mxu0
        %v2249 = vadd.f32 %v2162, %v2248
        %v2250 = vpop.f32.mrf.mxu0
        %v2251 = vadd.f32 %v2162, %v2250
        %2252 = vmatmul.bf16.gmra.mxu0 %v2189
        %v2253 = vpop.f32.mrf.mxu0
        %v2254 = vadd.f32 %v2162, %v2253
        %v2255 = vpop.f32.mrf.mxu0
        %v2256 = vadd.f32 %v2162, %v2255
        %2257 = vmatmul.bf16.gmra.mxu0 %v2192
        %v2258 = vpop.f32.mrf.mxu0
        %v2259 = vadd.f32 %v2162, %v2258
        %v2260 = vpop.f32.mrf.mxu0
        %v2261 = vadd.f32 %v2162, %v2260
        %2262 = vmatmul.bf16.gmra.mxu0 %v2195
        %v2263 = vpop.f32.mrf.mxu0
        %v2264 = vadd.f32 %v2162, %v2263
        %v2265 = vpop.f32.mrf.mxu0
        %v2266 = vadd.f32 %v2162, %v2265
        %2267 = vmatmul.bf16.gmra.mxu0 %v2198
        %v2268 = vpop.f32.mrf.mxu0
        %v2269 = vadd.f32 %v2162, %v2268
        %v2270 = vpop.f32.mrf.mxu0
        %v2271 = vadd.f32 %v2162, %v2270
        %2272 = vmatmul.bf16.gmra.mxu0 %v2201
        %v2273 = vpop.f32.mrf.mxu0
        %v2274 = vadd.f32 %v2162, %v2273
        %v2275 = vpop.f32.mrf.mxu0
        %v2276 = vadd.f32 %v2162, %v2275
        %2277 = vmatmul.bf16.gmra.mxu0 %v2204
        %v2278 = vpop.f32.mrf.mxu0
        %v2279 = vadd.f32 %v2162, %v2278
        %v2280 = vpop.f32.mrf.mxu0
        %v2281 = vadd.f32 %v2162, %v2280
        %2282 = vmatmul.bf16.gmra.mxu0 %v2207
        %v2283 = vpop.f32.mrf.mxu0
        %v2284 = vadd.f32 %v2162, %v2283
        %v2285 = vpop.f32.mrf.mxu0
        %v2286 = vadd.f32 %v2162, %v2285
        %2287 = vmatmul.bf16.gmra.mxu0 %v2210
        %v2288 = vpop.f32.mrf.mxu0
        %v2289 = vadd.f32 %v2162, %v2288
        %v2290 = vpop.f32.mrf.mxu0
        %v2291 = vadd.f32 %v2162, %v2290
        %2292 = vmatmul.bf16.gmra.mxu0 %v2213
        %v2293 = vpop.f32.mrf.mxu0
        %v2294 = vadd.f32 %v2162, %v2293
        %v2295 = vpop.f32.mrf.mxu0
        %v2296 = vadd.f32 %v2162, %v2295
        %2297 = vmatmul.bf16.gmra.mxu0 %v2216
        %v2298 = vpop.f32.mrf.mxu0
        %v2299 = vadd.f32 %v2162, %v2298
        %v2300 = vpop.f32.mrf.mxu0
        %v2301 = vadd.f32 %v2162, %v2300
        %2302 = vmatmul.bf16.gmra.mxu0 %v2219
        %v2303 = vpop.f32.mrf.mxu0
        %v2304 = vadd.f32 %v2162, %v2303
        %v2305 = vpop.f32.mrf.mxu0
        %v2306 = vadd.f32 %v2162, %v2305
        %2307 = vmatmul.bf16.gmra.mxu0 %v2222
        %v2308 = vpop.f32.mrf.mxu0
        %v2309 = vadd.f32 %v2162, %v2308
        %v2310 = vpop.f32.mrf.mxu0
        %v2311 = vadd.f32 %v2162, %v2310
        %2312 = vdwg.mxu0
        %v2313 = vunpack.c.l.bf16 %v411
        %v2314 = vunpack.c.l.bf16 %v412
        %v2315 = vunpack.c.l.bf16 %v413
        %v2316 = vunpack.c.l.bf16 %v414
        %v2317 = vunpack.c.l.bf16 %v415
        %v2318 = vunpack.c.l.bf16 %v416
        %v2319 = vunpack.c.l.bf16 %v417
        %v2320 = vunpack.c.l.bf16 %v418
        %v2321 = vunpack.c.l.bf16 %v419
        %v2322 = vunpack.c.l.bf16 %v420
        %v2323 = vunpack.c.l.bf16 %v421
        %v2324 = vunpack.c.l.bf16 %v422
        %v2325 = vunpack.c.l.bf16 %v423
        %v2326 = vunpack.c.l.bf16 %v424
        %v2327 = vunpack.c.l.bf16 %v425
        %v2328 = vunpack.c.l.bf16 %v426
        %v2329 = vunpack.c.l.bf16 %v427
        %v2330 = vunpack.c.l.bf16 %v428
        %v2331 = vunpack.c.l.bf16 %v429
        %v2332 = vunpack.c.l.bf16 %v430
        %v2333 = vunpack.c.l.bf16 %v431
        %v2334 = vunpack.c.l.bf16 %v432
        %v2335 = vunpack.c.l.bf16 %v433
        %v2336 = vunpack.c.l.bf16 %v434
        %v2337 = vunpack.c.l.bf16 %v435
        %v2338 = vunpack.c.l.bf16 %v436
        %v2339 = vunpack.c.l.bf16 %v437
        %v2340 = vunpack.c.l.bf16 %v438
        %v2341 = vunpack.c.l.bf16 %v439
        %v2342 = vunpack.c.l.bf16 %v440
        %v2343 = vunpack.c.l.bf16 %v441
        %v2344 = vunpack.c.l.bf16 %v442
        %v2345 = vadd.f32 %v2234, %v2313
        %v2346 = vadd.f32 %v2236, %v2314
        %v2347 = vadd.f32 %v2239, %v2315
        %v2348 = vadd.f32 %v2241, %v2316
        %v2349 = vadd.f32 %v2244, %v2317
        %v2350 = vadd.f32 %v2246, %v2318
        %v2351 = vadd.f32 %v2249, %v2319
        %v2352 = vadd.f32 %v2251, %v2320
        %v2353 = vadd.f32 %v2254, %v2321
        %v2354 = vadd.f32 %v2256, %v2322
        %v2355 = vadd.f32 %v2259, %v2323
        %v2356 = vadd.f32 %v2261, %v2324
        %v2357 = vadd.f32 %v2264, %v2325
        %v2358 = vadd.f32 %v2266, %v2326
        %v2359 = vadd.f32 %v2269, %v2327
        %v2360 = vadd.f32 %v2271, %v2328
        %v2361 = vadd.f32 %v2274, %v2329
        %v2362 = vadd.f32 %v2276, %v2330
        %v2363 = vadd.f32 %v2279, %v2331
        %v2364 = vadd.f32 %v2281, %v2332
        %v2365 = vadd.f32 %v2284, %v2333
        %v2366 = vadd.f32 %v2286, %v2334
        %v2367 = vadd.f32 %v2289, %v2335
        %v2368 = vadd.f32 %v2291, %v2336
        %v2369 = vadd.f32 %v2294, %v2337
        %v2370 = vadd.f32 %v2296, %v2338
        %v2371 = vadd.f32 %v2299, %v2339
        %v2372 = vadd.f32 %v2301, %v2340
        %v2373 = vadd.f32 %v2304, %v2341
        %v2374 = vadd.f32 %v2306, %v2342
        %v2375 = vadd.f32 %v2309, %v2343
        %v2376 = vadd.f32 %v2311, %v2344
        %v2377 = vsel %vm559, %v2345, 0.0
        %v2378 = vsel %vm559, %v2346, 0.0
        %v2379 = vadd.f32 %v2377, %v2378
        %v2380 = vsel %vm559, %v2347, 0.0
        %v2381 = vadd.f32 %v2379, %v2380
        %v2382 = vsel %vm559, %v2348, 0.0
        %v2383 = vadd.f32 %v2381, %v2382
        %v2384 = vsel %vm559, %v2349, 0.0
        %v2385 = vadd.f32 %v2383, %v2384
        %v2386 = vsel %vm559, %v2350, 0.0
        %v2387 = vadd.f32 %v2385, %v2386
        %v2388 = vsel %vm559, %v2351, 0.0
        %v2389 = vadd.f32 %v2387, %v2388
        %v2390 = vsel %vm559, %v2352, 0.0
        %v2391 = vadd.f32 %v2389, %v2390
        %v2392 = vrot.slane %v2391, 4
        %v2393 = vadd.f32 %v2391, %v2392
        %v2394 = vrot.slane %v2393, 2
        %v2395 = vadd.f32 %v2393, %v2394
        %v2396 = vrot.slane %v2395, 1
        %v2397 = vadd.f32 %v2395, %v2396
        %v2398 = vsel %vm559, %v2353, 0.0
        %v2399 = vsel %vm559, %v2354, 0.0
        %v2400 = vadd.f32 %v2398, %v2399
        %v2401 = vsel %vm559, %v2355, 0.0
        %v2402 = vadd.f32 %v2400, %v2401
        %v2403 = vsel %vm559, %v2356, 0.0
        %v2404 = vadd.f32 %v2402, %v2403
        %v2405 = vsel %vm559, %v2357, 0.0
        %v2406 = vadd.f32 %v2404, %v2405
        %v2407 = vsel %vm559, %v2358, 0.0
        %v2408 = vadd.f32 %v2406, %v2407
        %v2409 = vsel %vm559, %v2359, 0.0
        %v2410 = vadd.f32 %v2408, %v2409
        %v2411 = vsel %vm559, %v2360, 0.0
        %v2412 = vadd.f32 %v2410, %v2411
        %v2413 = vrot.slane %v2412, 4
        %v2414 = vadd.f32 %v2412, %v2413
        %v2415 = vrot.slane %v2414, 2
        %v2416 = vadd.f32 %v2414, %v2415
        %v2417 = vrot.slane %v2416, 1
        %v2418 = vadd.f32 %v2416, %v2417
        %v2419 = vsel %vm559, %v2361, 0.0
        %v2420 = vsel %vm559, %v2362, 0.0
        %v2421 = vadd.f32 %v2419, %v2420
        %v2422 = vsel %vm559, %v2363, 0.0
        %v2423 = vadd.f32 %v2421, %v2422
        %v2424 = vsel %vm559, %v2364, 0.0
        %v2425 = vadd.f32 %v2423, %v2424
        %v2426 = vsel %vm559, %v2365, 0.0
        %v2427 = vadd.f32 %v2425, %v2426
        %v2428 = vsel %vm559, %v2366, 0.0
        %v2429 = vadd.f32 %v2427, %v2428
        %v2430 = vsel %vm559, %v2367, 0.0
        %v2431 = vadd.f32 %v2429, %v2430
        %v2432 = vsel %vm559, %v2368, 0.0
        %v2433 = vadd.f32 %v2431, %v2432
        %v2434 = vrot.slane %v2433, 4
        %v2435 = vadd.f32 %v2433, %v2434
        %v2436 = vrot.slane %v2435, 2
        %v2437 = vadd.f32 %v2435, %v2436
        %v2438 = vrot.slane %v2437, 1
        %v2439 = vadd.f32 %v2437, %v2438
        %v2440 = vsel %vm559, %v2369, 0.0
        %v2441 = vsel %vm559, %v2370, 0.0
        %v2442 = vadd.f32 %v2440, %v2441
        %v2443 = vsel %vm559, %v2371, 0.0
        %v2444 = vadd.f32 %v2442, %v2443
        %v2445 = vsel %vm559, %v2372, 0.0
        %v2446 = vadd.f32 %v2444, %v2445
        %v2447 = vsel %vm559, %v2373, 0.0
        %v2448 = vadd.f32 %v2446, %v2447
        %v2449 = vsel %vm559, %v2374, 0.0
        %v2450 = vadd.f32 %v2448, %v2449
        %v2451 = vsel %vm559, %v2375, 0.0
        %v2452 = vadd.f32 %v2450, %v2451
        %v2453 = vsel %vm559, %v2376, 0.0
        %v2454 = vadd.f32 %v2452, %v2453
        %v2455 = vrot.slane %v2454, 4
        %v2456 = vadd.f32 %v2454, %v2455
        %v2457 = vrot.slane %v2456, 2
        %v2458 = vadd.f32 %v2456, %v2457
        %v2459 = vrot.slane %v2458, 1
        %v2460 = vadd.f32 %v2458, %v2459
        %v2461 = vrcp.pop 64.0
        %v2462 = vmul.f32 64.0, %v2461
        %v2463 = vsub.f32 1.0, %v2462
        %v2464 = vmul.f32 %v2461, %v2463
        %v2465 = vadd.f32 %v2461, %v2464
        %vm2466 = vweird.f32 %v2461
        %v2467 = vsel %vm2466, %v2461, %v2465
        %v2468 = vmul.f32 %v2397, %v2467
        %v2469 = vmul.f32 %v2418, %v2467
        %v2470 = vmul.f32 %v2439, %v2467
        %v2471 = vmul.f32 %v2460, %v2467
        %v2472 = vpack.c.bf16 %v2468, %v2468
        %v2473 = vpack.c.bf16 %v2469, %v2469
        %v2474 = vpack.c.bf16 %v2470, %v2470
        %v2475 = vpack.c.bf16 %v2471, %v2471
        %v2476 = vld [vmem:[%s9] sm:$0xf]
        %v2477 = vld [vmem:[%s9 + $0x4] sm:$0xf]
        %v2478 = vld [vmem:[%s9 + $0x8] sm:$0xf]
        %v2479 = vld [vmem:[%s9 + $0xc] sm:$0xf]
        %v2480 = vld [vmem:[%s9 + $0x10] sm:$0xf]
        %v2481 = vld [vmem:[%s9 + $0x14] sm:$0xf]
        %v2482 = vld [vmem:[%s9 + $0x18] sm:$0xf]
        %v2483 = vld [vmem:[%s9 + $0x1c] sm:$0xf]
        %v2488 = vunpack.c.l.b16 %v2472
        %v2489 = vunpack.c.l.b16 %v2473
        %v2490 = vunpack.c.l.b16 %v2474
        %v2491 = vunpack.c.l.b16 %v2475
        %vm2492 = vcmask 1041409
        %v2493 = vsel %vm2492, %v2489, %v2488
        %vm2494 = vcmask 1042434
        %v2495 = vsel %vm2494, %v2490, %v2493
        %vm2496 = vcmask 1043459
        %v2497 = vsel %vm2496, %v2491, %v2495
        %v2498 = vpack.c.b16 %v2497, %v2497
        %v2507 = vunpack.c.l.b16 %v2476
        %v2508 = vunpack.c.l.b16 %v2477
        %v2509 = vunpack.c.l.b16 %v2478
        %v2510 = vunpack.c.l.b16 %v2479
        %v2511 = vunpack.c.l.b16 %v2480
        %v2512 = vunpack.c.l.b16 %v2481
        %v2513 = vunpack.c.l.b16 %v2482
        %v2514 = vunpack.c.l.b16 %v2483
        %v2515 = vpack.c.b16 %v2508, %v2507
        %v2516 = vpack.c.b16 %v2510, %v2509
        %v2517 = vpack.c.b16 %v2512, %v2511
        %v2518 = vpack.c.b16 %v2514, %v2513
        %v2524 = vsel %vm559, %v2498, 0
        %2526 = vmatpush.bf16.msra.mxu0 0
        %2527 = vmatpush.bf16.msra.mxu0 0
        %2528 = vmatpush.bf16.msra.mxu0 0
        %2529 = vmatpush.bf16.msra.mxu0 0
        %2530 = vmatpush.bf16.msra.mxu0 %v2518
        %2531 = vmatpush.bf16.msra.mxu0 %v2517
        %2532 = vmatpush.bf16.msra.mxu0 %v2516
        %2533 = vmatpush.bf16.msra.mxu0 %v2515
        %2534 = vmatmul.bf16.gmra.mxu0 %v2524
        %v2535 = vpop.f32.mrf.mxu0
        %v2536 = vadd.f32 0.0, %v2535
        %v2537 = vpop.f32.mrf.mxu0
        %2538 = vdwg.mxu0
        %v2539 = vmax.f32 %v2536, 0.0
        %v2540 = vpack.c.bf16 %v2539, %v2539
        %v2541 = vld [vmem:[%s10] sm:$0x3]
        %vm2542 = vcmask 31744
        %v2544 = vsel %vm2542, %v2540, 0
        %vm2546 = vcmask 1041408
        %v2548 = vsel %vm2546, %v2541, 0
        %2550 = vmatpush.bf16.msra.mxu0 0
        %2551 = vmatpush.bf16.msra.mxu0 0
        %2552 = vmatpush.bf16.msra.mxu0 0
        %2553 = vmatpush.bf16.msra.mxu0 0
        %2554 = vmatpush.bf16.msra.mxu0 0
        %2555 = vmatpush.bf16.msra.mxu0 0
        %2556 = vmatpush.bf16.msra.mxu0 0
        %2557 = vmatpush.bf16.msra.mxu0 %v2548
        %2558 = vmatmul.bf16.gmra.mxu0 %v2544
        %v2559 = vpop.f32.mrf.mxu0
        %v2560 = vadd.f32 0.0, %v2559
        %v2561 = vpop.f32.mrf.mxu0
        %2562 = vdwg.mxu0
        %v2563 = vxor.u32 %v2560, 2147483648
        %v2564 = vmul.f32 %v2563, 1.442695
        %v2565 = vpow.pop %v2564
        %v2566 = vadd.f32 %v2565, 1.0
        %v2567 = vrcp.pop %v2566
        %v2568 = vmul.f32 %v2566, %v2567
        %v2569 = vsub.f32 1.0, %v2568
        %v2570 = vmul.f32 %v2567, %v2569
        %v2571 = vadd.f32 %v2567, %v2570
        %vm2572 = vweird.f32 %v2566
        %vm2573 = vweird.f32 %v2567
        %vm2574 = vmor %vm2572, %vm2573
        %v2575 = vsel %vm2574, %v2567, %v2571
        %v2576 = vand.u32 2147483647, %v2566
        %vm2577 = vcmp.eq.f32.partialorder %v2576, 8.507059e+37
        %v2578 = vand.u32 %v2566, 2147483648
        %v2579 = vor.u32 1.1754944e-38, %v2578
        %v2580 = vsel %vm2577, %v2579, %v2575
        %v2581 = vmul.f32 1.0, %v2580
        %v2583 = vrot.slane %v2581, 1
        %v2584 = vrot.slane %v2581, 2
        %v2585 = vrot.slane %v2581, 3
        %v2586 = vperm.slane %v2581, 0
        %v2587 = vperm.slane %v2583, 0
        %v2588 = vperm.slane %v2584, 0
        %v2589 = vperm.slane %v2585, 0
        %v2594 = vmul.f32 %v2345, %v2586
        %v2595 = vmul.f32 %v2346, %v2586
        %v2596 = vmul.f32 %v2347, %v2586
        %v2597 = vmul.f32 %v2348, %v2586
        %v2598 = vmul.f32 %v2349, %v2586
        %v2599 = vmul.f32 %v2350, %v2586
        %v2600 = vmul.f32 %v2351, %v2586
        %v2601 = vmul.f32 %v2352, %v2586
        %v2602 = vmul.f32 %v2353, %v2587
        %v2603 = vmul.f32 %v2354, %v2587
        %v2604 = vmul.f32 %v2355, %v2587
        %v2605 = vmul.f32 %v2356, %v2587
        %v2606 = vmul.f32 %v2357, %v2587
        %v2607 = vmul.f32 %v2358, %v2587
        %v2608 = vmul.f32 %v2359, %v2587
        %v2609 = vmul.f32 %v2360, %v2587
        %v2610 = vmul.f32 %v2361, %v2588
        %v2611 = vmul.f32 %v2362, %v2588
        %v2612 = vmul.f32 %v2363, %v2588
        %v2613 = vmul.f32 %v2364, %v2588
        %v2614 = vmul.f32 %v2365, %v2588
        %v2615 = vmul.f32 %v2366, %v2588
        %v2616 = vmul.f32 %v2367, %v2588
        %v2617 = vmul.f32 %v2368, %v2588
        %v2618 = vmul.f32 %v2369, %v2589
        %v2619 = vmul.f32 %v2370, %v2589
        %v2620 = vmul.f32 %v2371, %v2589
        %v2621 = vmul.f32 %v2372, %v2589
        %v2622 = vmul.f32 %v2373, %v2589
        %v2623 = vmul.f32 %v2374, %v2589
        %v2624 = vmul.f32 %v2375, %v2589
        %v2625 = vmul.f32 %v2376, %v2589
        %v2626 = vsel %vm559, %v2594, 0.0
        %v2627 = vsel %vm559, %v2595, 0.0
        %v2628 = vadd.f32 %v2626, %v2627
        %v2629 = vsel %vm559, %v2596, 0.0
        %v2630 = vadd.f32 %v2628, %v2629
        %v2631 = vsel %vm559, %v2597, 0.0
        %v2632 = vadd.f32 %v2630, %v2631
        %v2633 = vsel %vm559, %v2598, 0.0
        %v2634 = vadd.f32 %v2632, %v2633
        %v2635 = vsel %vm559, %v2599, 0.0
        %v2636 = vadd.f32 %v2634, %v2635
        %v2637 = vsel %vm559, %v2600, 0.0
        %v2638 = vadd.f32 %v2636, %v2637
        %v2639 = vsel %vm559, %v2601, 0.0
        %v2640 = vadd.f32 %v2638, %v2639
        %v2641 = vrot.slane %v2640, 4
        %v2642 = vadd.f32 %v2640, %v2641
        %v2643 = vrot.slane %v2642, 2
        %v2644 = vadd.f32 %v2642, %v2643
        %v2645 = vrot.slane %v2644, 1
        %v2646 = vadd.f32 %v2644, %v2645
        %v2647 = vsel %vm559, %v2602, 0.0
        %v2648 = vsel %vm559, %v2603, 0.0
        %v2649 = vadd.f32 %v2647, %v2648
        %v2650 = vsel %vm559, %v2604, 0.0
        %v2651 = vadd.f32 %v2649, %v2650
        %v2652 = vsel %vm559, %v2605, 0.0
        %v2653 = vadd.f32 %v2651, %v2652
        %v2654 = vsel %vm559, %v2606, 0.0
        %v2655 = vadd.f32 %v2653, %v2654
        %v2656 = vsel %vm559, %v2607, 0.0
        %v2657 = vadd.f32 %v2655, %v2656
        %v2658 = vsel %vm559, %v2608, 0.0
        %v2659 = vadd.f32 %v2657, %v2658
        %v2660 = vsel %vm559, %v2609, 0.0
        %v2661 = vadd.f32 %v2659, %v2660
        %v2662 = vrot.slane %v2661, 4
        %v2663 = vadd.f32 %v2661, %v2662
        %v2664 = vrot.slane %v2663, 2
        %v2665 = vadd.f32 %v2663, %v2664
        %v2666 = vrot.slane %v2665, 1
        %v2667 = vadd.f32 %v2665, %v2666
        %v2668 = vsel %vm559, %v2610, 0.0
        %v2669 = vsel %vm559, %v2611, 0.0
        %v2670 = vadd.f32 %v2668, %v2669
        %v2671 = vsel %vm559, %v2612, 0.0
        %v2672 = vadd.f32 %v2670, %v2671
        %v2673 = vsel %vm559, %v2613, 0.0
        %v2674 = vadd.f32 %v2672, %v2673
        %v2675 = vsel %vm559, %v2614, 0.0
        %v2676 = vadd.f32 %v2674, %v2675
        %v2677 = vsel %vm559, %v2615, 0.0
        %v2678 = vadd.f32 %v2676, %v2677
        %v2679 = vsel %vm559, %v2616, 0.0
        %v2680 = vadd.f32 %v2678, %v2679
        %v2681 = vsel %vm559, %v2617, 0.0
        %v2682 = vadd.f32 %v2680, %v2681
        %v2683 = vrot.slane %v2682, 4
        %v2684 = vadd.f32 %v2682, %v2683
        %v2685 = vrot.slane %v2684, 2
        %v2686 = vadd.f32 %v2684, %v2685
        %v2687 = vrot.slane %v2686, 1
        %v2688 = vadd.f32 %v2686, %v2687
        %v2689 = vsel %vm559, %v2618, 0.0
        %v2690 = vsel %vm559, %v2619, 0.0
        %v2691 = vadd.f32 %v2689, %v2690
        %v2692 = vsel %vm559, %v2620, 0.0
        %v2693 = vadd.f32 %v2691, %v2692
        %v2694 = vsel %vm559, %v2621, 0.0
        %v2695 = vadd.f32 %v2693, %v2694
        %v2696 = vsel %vm559, %v2622, 0.0
        %v2697 = vadd.f32 %v2695, %v2696
        %v2698 = vsel %vm559, %v2623, 0.0
        %v2699 = vadd.f32 %v2697, %v2698
        %v2700 = vsel %vm559, %v2624, 0.0
        %v2701 = vadd.f32 %v2699, %v2700
        %v2702 = vsel %vm559, %v2625, 0.0
        %v2703 = vadd.f32 %v2701, %v2702
        %v2704 = vrot.slane %v2703, 4
        %v2705 = vadd.f32 %v2703, %v2704
        %v2706 = vrot.slane %v2705, 2
        %v2707 = vadd.f32 %v2705, %v2706
        %v2708 = vrot.slane %v2707, 1
        %v2709 = vadd.f32 %v2707, %v2708
        %v2710 = vmul.f32 %v2646, %v2467
        %v2711 = vmul.f32 %v2667, %v2467
        %v2712 = vmul.f32 %v2688, %v2467
        %v2713 = vmul.f32 %v2709, %v2467
        %v2714 = vsel %vm559, %v2594, -inf
        %v2715 = vsel %vm559, %v2595, -inf
        %v2716 = vmax.f32 %v2714, %v2715
        %v2717 = vsel %vm559, %v2596, -inf
        %v2718 = vmax.f32 %v2716, %v2717
        %v2719 = vsel %vm559, %v2597, -inf
        %v2720 = vmax.f32 %v2718, %v2719
        %v2721 = vsel %vm559, %v2598, -inf
        %v2722 = vmax.f32 %v2720, %v2721
        %v2723 = vsel %vm559, %v2599, -inf
        %v2724 = vmax.f32 %v2722, %v2723
        %v2725 = vsel %vm559, %v2600, -inf
        %v2726 = vmax.f32 %v2724, %v2725
        %v2727 = vsel %vm559, %v2601, -inf
        %v2728 = vmax.f32 %v2726, %v2727
        %v2729 = vrot.slane %v2728, 4
        %v2730 = vmax.f32 %v2728, %v2729
        %v2731 = vrot.slane %v2730, 2
        %v2732 = vmax.f32 %v2730, %v2731
        %v2733 = vrot.slane %v2732, 1
        %v2734 = vmax.f32 %v2732, %v2733
        %v2735 = vsel %vm559, %v2602, -inf
        %v2736 = vsel %vm559, %v2603, -inf
        %v2737 = vmax.f32 %v2735, %v2736
        %v2738 = vsel %vm559, %v2604, -inf
        %v2739 = vmax.f32 %v2737, %v2738
        %v2740 = vsel %vm559, %v2605, -inf
        %v2741 = vmax.f32 %v2739, %v2740
        %v2742 = vsel %vm559, %v2606, -inf
        %v2743 = vmax.f32 %v2741, %v2742
        %v2744 = vsel %vm559, %v2607, -inf
        %v2745 = vmax.f32 %v2743, %v2744
        %v2746 = vsel %vm559, %v2608, -inf
        %v2747 = vmax.f32 %v2745, %v2746
        %v2748 = vsel %vm559, %v2609, -inf
        %v2749 = vmax.f32 %v2747, %v2748
        %v2750 = vrot.slane %v2749, 4
        %v2751 = vmax.f32 %v2749, %v2750
        %v2752 = vrot.slane %v2751, 2
        %v2753 = vmax.f32 %v2751, %v2752
        %v2754 = vrot.slane %v2753, 1
        %v2755 = vmax.f32 %v2753, %v2754
        %v2756 = vsel %vm559, %v2610, -inf
        %v2757 = vsel %vm559, %v2611, -inf
        %v2758 = vmax.f32 %v2756, %v2757
        %v2759 = vsel %vm559, %v2612, -inf
        %v2760 = vmax.f32 %v2758, %v2759
        %v2761 = vsel %vm559, %v2613, -inf
        %v2762 = vmax.f32 %v2760, %v2761
        %v2763 = vsel %vm559, %v2614, -inf
        %v2764 = vmax.f32 %v2762, %v2763
        %v2765 = vsel %vm559, %v2615, -inf
        %v2766 = vmax.f32 %v2764, %v2765
        %v2767 = vsel %vm559, %v2616, -inf
        %v2768 = vmax.f32 %v2766, %v2767
        %v2769 = vsel %vm559, %v2617, -inf
        %v2770 = vmax.f32 %v2768, %v2769
        %v2771 = vrot.slane %v2770, 4
        %v2772 = vmax.f32 %v2770, %v2771
        %v2773 = vrot.slane %v2772, 2
        %v2774 = vmax.f32 %v2772, %v2773
        %v2775 = vrot.slane %v2774, 1
        %v2776 = vmax.f32 %v2774, %v2775
        %v2777 = vsel %vm559, %v2618, -inf
        %v2778 = vsel %vm559, %v2619, -inf
        %v2779 = vmax.f32 %v2777, %v2778
        %v2780 = vsel %vm559, %v2620, -inf
        %v2781 = vmax.f32 %v2779, %v2780
        %v2782 = vsel %vm559, %v2621, -inf
        %v2783 = vmax.f32 %v2781, %v2782
        %v2784 = vsel %vm559, %v2622, -inf
        %v2785 = vmax.f32 %v2783, %v2784
        %v2786 = vsel %vm559, %v2623, -inf
        %v2787 = vmax.f32 %v2785, %v2786
        %v2788 = vsel %vm559, %v2624, -inf
        %v2789 = vmax.f32 %v2787, %v2788
        %v2790 = vsel %vm559, %v2625, -inf
        %v2791 = vmax.f32 %v2789, %v2790
        %v2792 = vrot.slane %v2791, 4
        %v2793 = vmax.f32 %v2791, %v2792
        %v2794 = vrot.slane %v2793, 2
        %v2795 = vmax.f32 %v2793, %v2794
        %v2796 = vrot.slane %v2795, 1
        %v2797 = vmax.f32 %v2795, %v2796
        %v2798 = vadd.f32 %v2710, %v2734
        %v2799 = vadd.f32 %v2711, %v2755
        %v2800 = vadd.f32 %v2712, %v2776
        %v2801 = vadd.f32 %v2713, %v2797
        %vm2802 = vcmask 516096
        %2803 = vst.msk [vmem:[%s407] sm:$0x1] %vm2802, %v2798
        %2804 = vst.msk [vmem:[%s407 + $0x1] sm:$0x1] %vm2802, %v2799
        %2805 = vst.msk [vmem:[%s407 + $0x2] sm:$0x1] %vm2802, %v2800
        %2806 = vst.msk [vmem:[%s407 + $0x3] sm:$0x1] %vm2802, %v2801
        %s2807 = sand.u32 %s272, 1
        %s2808 = scalar_lea.sflag [#allocation4], %s2807
        %s2809 = sand.u32 %s272, 1
        %s2810 = smul.addr %s2809, 4
        %s2811 = scalar_lea.vmem [#allocation5], %s2810
        // Predicated region
        $region69: #{tpu_custom_call.1} parent=63 // pred_check
          %p2812 = pneg %p282
        $region70: #{tpu_custom_call.1} parent=63 // pred_check_branch
          %2814 = sbr.rel (%p2812) target = $region72
        $region71: #{tpu_custom_call.1} parent=63 // pred_region
          %s2815 = smul.u32 4, %s28
          %2817 = vsyncadd %s2808, 0
          %s2818 = scalar_lea.hbm %s11, %s2815
          %s2819 = sshll.u32 %s2811, 4
          %s2820 = int_to_ptr.vmem [resolvable:$true] %s2819
          %s2821 = sshll.u32 %s2818, 4
          %s2822 = int_to_ptr.hbm [resolvable:$true] %s2821
          %2827 = dma.vmem_to_hbm [thread:$0]  %s2820, 64, %s2822, %s2808, 16, 16, 1
        $region72: #{tpu_custom_call.1} parent=63 // pred_fallthru
          _
      $region64: #{tpu_custom_call.1} parent=5 // pred_fallthru
        _
      %p2828 = scmp.le.s32.totalorder 2, %s23
      // Predicated region
      $region73: #{tpu_custom_call.1} parent=5 // pred_check
        %p2829 = pneg %p2828
      $region74: #{tpu_custom_call.1} parent=5 // pred_check_branch
        %2831 = sbr.rel (%p2829) target = $region76
      $region75: #{tpu_custom_call.1} parent=5 // pred_region
        %s2832 = ssub.s32 %s23, 2
        // Predicated region
        $region77: #{tpu_custom_call.1} parent=75 // pred_check
          %p2833 = pneg %p288
        $region78: #{tpu_custom_call.1} parent=75 // pred_check_branch
          %2835 = sbr.rel (%p2833) target = $region80
        $region79: #{tpu_custom_call.1} parent=75 // pred_region
          %s2836 = sand.u32 %s273, 1
          %s2837 = scalar_lea.sflag [#allocation4], %s2836
          %s2838 = sand.u32 %s273, 1
          %s2839 = smul.addr %s2838, 4
          %s2840 = scalar_lea.vmem [#allocation5], %s2839
          %2842 = dma.done %s2837, 64
        $region80: #{tpu_custom_call.1} parent=75 // pred_fallthru
          _
      $region76: #{tpu_custom_call.1} parent=5 // pred_fallthru
        _
    $region6: #{tpu_custom_call.1} parent=1 // loop_footer
      %s27 = sadd.s32 1, %s23
    $region7: #{tpu_custom_call.1} parent=1 // loop_footer_branch
      %22 = sbr.rel target = $region3
    $region8: #{tpu_custom_call.1} parent=1 // loop_exit
      _
    %2843 = vsyncpa [#allocation3], 1
    %s2844 = scalar_lea.sflag [#allocation3], 1
    %2845 = vsyncpa %s2844, 1
    %2846 = vsyncpa [#allocation4], 1
    %s2847 = scalar_lea.sflag [#allocation4], 1
    %2848 = vsyncpa %s2847, 1

</llo_original>
